<compile_context>
chip_gen: v7x
topology: tpu7x:2x2x1
jax: 0.10.0
libtpu: 0.0.40
codegen_flags: <defaults>
</compile_context>

<pallas_src>
import functools

import jax
import jax.numpy as jnp
from jax.experimental import pallas as pl
from jax.experimental.pallas import tpu as pltpu


def _spatial_gate_kernel(w_ref, shift_ref, x2_ref, x3_ref, o_ref,
                         padmax_ref, padmean_ref, *, t):
    # w_ref:       (98,) f32 SMEM  -- conv weights (BN scale folded), idx = c*49 + kh*7 + kw
    # shift_ref:   (1,)  f32 SMEM  -- folded BatchNorm shift
    # x2_ref:      (bb, C,  H, W*T) VMEM block (native dtype)
    # x3_ref:      (bb, C3, H, W*T) VMEM block (native dtype)
    # o_ref:       (bb, C3, H, W*T) VMEM block (x3 dtype)
    # padmax_ref / padmean_ref: (bb, H+6, (W+6)*T) f32 VMEM scratch (zero-padded pooled maps)
    bb, C, H, WT = x2_ref.shape
    WTP = padmax_ref.shape[-1]           # (W + 6) * t
    PT = 3 * t                           # lane padding on each side of the fused W*T axis

    # --- ChannelPool: max & mean over the channel dim (leading-axis reduce, pure VPU).
    x2 = x2_ref[...].astype(jnp.float32)
    pooled_max = jnp.max(x2, axis=1)     # (bb, H, WT)  -> conv input channel 0
    pooled_mean = jnp.mean(x2, axis=1)   # (bb, H, WT)  -> conv input channel 1

    # --- Padded pooled maps.  Only the border strips are (re)zeroed each step
    # (the interior is fully overwritten); per-step zeroing keeps the border valid
    # on both megacore TensorCores (scratch is per-core and uninitialised).
    zrows = jnp.zeros((bb, 3, WTP), jnp.float32)
    zcols = jnp.zeros((bb, H, PT), jnp.float32)
    for pad_ref, pooled in ((padmax_ref, pooled_max), (padmean_ref, pooled_mean)):
        pad_ref[:, 0:3, :] = zrows                    # top border rows
        pad_ref[:, 3 + H:6 + H, :] = zrows            # bottom border rows
        pad_ref[:, 3:3 + H, 0:PT] = zcols             # left border lanes
        pad_ref[:, 3:3 + H, PT + WT:WTP] = zcols      # right border lanes
        pad_ref[:, 3:3 + H, PT:PT + WT] = pooled      # interior

    # --- 2x7x7 conv (kT == 1).  Too skinny for the MXU, so it runs on the VPU.
    # One VMEM band load per (channel, kh) -> 14 loads/step; each kw tap is an
    # in-register lane shift by kw*t (XLU relayout, no reload).  Four partial
    # accumulators (channel x kh-half) break the serial add chain; each is
    # initialised with its first tap instead of zeros.
    accs = []
    for pad_ref, base in ((padmax_ref, 0), (padmean_ref, 49)):
        for kh_range in (range(0, 4), range(4, 7)):
            acc = None
            for kh in kh_range:
                band = pad_ref[:, kh:kh + H, :]              # (bb, H, WTP), one load
                for kw in range(7):
                    wv = w_ref[base + kh * 7 + kw]           # SMEM scalar
                    tap = wv * band[:, :, kw * t:kw * t + WT]
                    acc = tap if acc is None else acc + tap
            accs.append(acc)
    conv = (accs[0] + accs[1]) + (accs[2] + accs[3])         # (bb, H, WT)

    # --- Folded BatchNorm shift + sigmoid -> per-pixel gate; gate x3d (broadcast
    # over its channel dim) and store once.
    scale = jax.nn.sigmoid(conv + shift_ref[0])              # (bb, H, WT) f32
    x3 = x3_ref[...].astype(jnp.float32)
    o_ref[...] = (x3 * scale[:, None, :, :]).astype(o_ref.dtype)


def _pick_block_batch(n, footprint, budget, prefer_even_steps):
    """Largest divisor of n that fits the VMEM budget; on 2-TC chips prefer an
    even number (>= 2) of grid steps so both TensorCores get work."""
    divisors = sorted((d for d in range(1, n + 1) if n % d == 0), reverse=True)
    if prefer_even_steps and n >= 2:
        for d in divisors:
            steps = n // d
            if footprint(d) <= budget and steps >= 2 and steps % 2 == 0:
                return d
        for d in divisors:
            if footprint(d) <= budget and n // d >= 2:
                return d
    for d in divisors:
        if footprint(d) <= budget:
            return d
    return 1


def spatial_gate(x2d, x3d, conv_w, bn_gamma, bn_beta, bn_mean, bn_var, *, eps=1e-5):
    """x2d: (B, C, H, W, T), x3d: (B, C3, H, W, T), conv_w: (1, 2, 7, 7, 1)
    (PyTorch Conv3d OIDHW layout), bn_*: (1,) BatchNorm3d inference params."""
    B, C, H, W, T = x2d.shape
    B3, C3, H3, W3, T3 = x3d.shape
    assert (B, H, W, T) == (B3, H3, W3, T3)
    assert conv_w.shape == (1, 2, 7, 7, 1)

    WT = W * T
    WTP = (W + 6) * T

    # Fold T into the lane axis.  W and T are the two innermost contiguous axes,
    # so these reshapes (and the final un-reshape) are free -- no transposes.
    x2 = x2d.reshape(B, C, H, WT)
    x3 = x3d.reshape(B, C3, H, WT)

    # Fold inference BatchNorm (single channel, conv has no bias) into the conv:
    #   bn(conv(x)) = (gamma/sqrt(var+eps)) * conv(x) + (beta - mean*gamma/sqrt(var+eps))
    inv = (bn_gamma[0] / jnp.sqrt(bn_var[0] + eps)).astype(jnp.float32)
    w_folded = (conv_w[0, :, :, :, 0].astype(jnp.float32) * inv).reshape(-1)   # (98,)
    shift = jnp.reshape(bn_beta[0] - bn_mean[0] * inv, (1,)).astype(jnp.float32)

    in2_b = jnp.dtype(x2d.dtype).itemsize
    in3_b = jnp.dtype(x3d.dtype).itemsize
    out_b = in3_b

    def footprint(bb):
        blocks = 2 * bb * H * WT * (C * in2_b + C3 * (in3_b + out_b))   # double-buffered I/O
        scratch = 2 * 4 * bb * (H + 6) * WTP                            # padded pooled maps
        live = 8 * 4 * bb * H * WTP                                     # pooled/band/acc values
        return blocks + scratch + live

    # Generation-aware VMEM budgeting (v7x: 64 MiB/TC + 2 TCs; v5e/v6e: 128 MiB, 1 TC).
    try:
        vmem_cap = int(pltpu.get_tpu_info().vmem_capacity_bytes)
    except Exception:
        vmem_cap = 64 * 1024 * 1024
    small_vmem = vmem_cap <= 96 * 1024 * 1024
    if small_vmem:
        budget = min(22 << 20, vmem_cap // 3)
        prefer_even_steps = True          # keep both TensorCores busy under "parallel"
    else:
        budget = min(48 << 20, vmem_cap // 2)
        prefer_even_steps = False         # single TC: bigger tiles beat step parallelism

    if footprint(1) > vmem_cap - (4 << 20):
        # TODO(synk): tile H for very large spatial maps instead of erroring.
        raise ValueError("SpatialGate: a single image does not fit in VMEM; "
                         "spatial (H) tiling is not implemented.")

    bb = _pick_block_batch(B, footprint, budget, prefer_even_steps)
    fp = footprint(bb)
    vmem_limit = int(min(vmem_cap - (2 << 20), max(2 * fp + (8 << 20), 24 << 20)))

    hbm_bytes = x2.size * in2_b + x3.size * in3_b + x3.size * out_b
    flops = 2 * B * C * H * WT + 2 * 98 * B * H * WT + B * C3 * H * WT

    out = pl.pallas_call(
        functools.partial(_spatial_gate_kernel, t=T),
        out_shape=jax.ShapeDtypeStruct((B, C3, H, WT), x3d.dtype),
        grid_spec=pltpu.PrefetchScalarGridSpec(
            num_scalar_prefetch=0,
            grid=(B // bb,),
            in_specs=[
                pl.BlockSpec(memory_space=pltpu.MemorySpace.SMEM),      # folded conv weights
                pl.BlockSpec(memory_space=pltpu.MemorySpace.SMEM),      # folded BN shift
                pl.BlockSpec((bb, C, H, WT), lambda i: (i, 0, 0, 0)),   # x2d block
                pl.BlockSpec((bb, C3, H, WT), lambda i: (i, 0, 0, 0)),  # x3d block
            ],
            out_specs=pl.BlockSpec((bb, C3, H, WT), lambda i: (i, 0, 0, 0)),
            scratch_shapes=[
                pltpu.VMEM((bb, H + 6, WTP), jnp.float32),   # padded max map
                pltpu.VMEM((bb, H + 6, WTP), jnp.float32),   # padded mean map
            ],
        ),
        compiler_params=pltpu.CompilerParams(
            dimension_semantics=("parallel",),
            vmem_limit_bytes=vmem_limit,
        ),
        cost_estimate=pl.CostEstimate(
            flops=int(flops),
            transcendentals=int(B * H * WT),
            bytes_accessed=int(hbm_bytes)),
    )(w_folded, shift, x2, x3)

    return out.reshape(B, C3, H, W, T)       # free un-reshape of the fused W*T axis


def spatial_gate_ref(x2d, x3d, conv_w, bn_gamma, bn_beta, bn_mean, bn_var, eps=1e-5):
    """Pure-JAX reference mirroring the PyTorch forward (inference-mode BN)."""
    pooled = jnp.concatenate(
        [jnp.max(x2d, axis=1, keepdims=True),
         jnp.mean(x2d, axis=1, keepdims=True)], axis=1)            # (B, 2, H, W, T)
    conv = jax.lax.conv_general_dilated(
        pooled.astype(jnp.float32), conv_w.astype(jnp.float32),
        window_strides=(1, 1, 1),
        padding=((3, 3), (3, 3), (0, 0)),
        dimension_numbers=("NCDHW", "OIDHW", "NCDHW"),
        precision=jax.lax.Precision.HIGHEST)                       # (B, 1, H, W, T)
    inv = bn_gamma[0] / jnp.sqrt(bn_var[0] + eps)
    bn = conv * inv + (bn_beta[0] - bn_mean[0] * inv)
    return jax.nn.sigmoid(bn) * x3d


if __name__ == "__main__":
    # Small shapes consistent with SpatialGate: 5-D inputs, 7x7x1 conv.
    B, C, C3, H, W, T = 2, 4, 8, 16, 16, 4

    key = jax.random.PRNGKey(0)
    k1, k2, k3, k4, k5, k6, k7 = jax.random.split(key, 7)

    x2d = jax.random.normal(k1, (B, C, H, W, T), dtype=jnp.float32)
    x3d = jax.random.normal(k2, (B, C3, H, W, T), dtype=jnp.float32)

    # Conv3d(2, 1, (7,7,1), bias=False) weight in PyTorch layout (O, I, kD, kH, kW).
    fan_in = 2 * 7 * 7 * 1
    bound = 1.0 / (fan_in ** 0.5)
    conv_w = jax.random.uniform(k3, (1, 2, 7, 7, 1), jnp.float32, -bound, bound)

    # BatchNorm3d(1) inference parameters.
    bn_gamma = jax.random.uniform(k4, (1,), jnp.float32, 0.5, 1.5)
    bn_beta = 0.1 * jax.random.normal(k5, (1,), jnp.float32)
    bn_mean = 0.1 * jax.random.normal(k6, (1,), jnp.float32)
    bn_var = jax.random.uniform(k7, (1,), jnp.float32, 0.5, 1.5)

    out = spatial_gate(x2d, x3d, conv_w, bn_gamma, bn_beta, bn_mean, bn_var)
    out = jax.block_until_ready(out)

    ref = jax.block_until_ready(
        spatial_gate_ref(x2d, x3d, conv_w, bn_gamma, bn_beta, bn_mean, bn_var))

    assert out.shape == x3d.shape
    err = float(jnp.max(jnp.abs(out - ref)))
    assert jnp.allclose(out, ref, atol=1e-5, rtol=1e-5), f"mismatch vs reference: {err}"

    print("KERNEL_OK")
</pallas_src>

<mosaic_0001>
module attributes {stable_mosaic.version = 11 : i64} {
  func.func @_spatial_gate_kernel(%arg0: i32, %arg1: memref<98xf32, #tpu.memory_space<smem>>, %arg2: memref<1xf32, #tpu.memory_space<smem>>, %arg3: memref<1x4x16x64xf32, #tpu.memory_space<vmem>>, %arg4: memref<1x8x16x64xf32, #tpu.memory_space<vmem>>, %arg5: memref<1x8x16x64xf32, #tpu.memory_space<vmem>>, %arg6: memref<1x22x88xf32, #tpu.memory_space<vmem>>, %arg7: memref<1x22x88xf32, #tpu.memory_space<vmem>>) attributes {dimension_semantics = [#tpu.dimension_semantics<parallel>], iteration_bounds = array<i64: 2>, scalar_prefetch = 0 : i64, scratch_operands = 2 : i64, tpu.core_type = #tpu.core_type<tc>, window_params = [{transform_indices = @transform_0, window_bounds = array<i64: 98>}, {transform_indices = @transform_1, window_bounds = array<i64: 1>}, {transform_indices = @transform_2, window_bounds = array<i64: 1, 4, 16, 64>}, {transform_indices = @transform_3, window_bounds = array<i64: 1, 8, 16, 64>}, {transform_indices = @transform_4, window_bounds = array<i64: 1, 8, 16, 64>}]} {
    %c0 = arith.constant 0 : index
    %c0_0 = arith.constant 0 : index
    %c0_1 = arith.constant 0 : index
    %c0_2 = arith.constant 0 : index
    %0 = vector.load %arg3[%c0, %c0_0, %c0_1, %c0_2] : memref<1x4x16x64xf32, #tpu.memory_space<vmem>>, vector<1x4x16x64xf32>
    %cst = arith.constant dense<0xFF800000> : vector<1x16x64xf32>
    %1 = vector.multi_reduction <maximumf>, %0, %cst [1] : vector<1x4x16x64xf32> to vector<1x16x64xf32>
    %cst_3 = arith.constant dense<0.000000e+00> : vector<1x16x64xf32>
    %2 = vector.multi_reduction <add>, %0, %cst_3 [1] : vector<1x4x16x64xf32> to vector<1x16x64xf32>
    %cst_4 = arith.constant 4.000000e+00 : f32
    %3 = vector.broadcast %cst_4 : f32 to vector<1x16x64xf32>
    %4 = arith.divf %2, %3 : vector<1x16x64xf32>
    %cst_5 = arith.constant 0.000000e+00 : f32
    %5 = vector.broadcast %cst_5 : f32 to vector<1x3x88xf32>
    %cst_6 = arith.constant 0.000000e+00 : f32
    %6 = vector.broadcast %cst_6 : f32 to vector<1x16x12xf32>
    %c0_7 = arith.constant 0 : index
    %c0_8 = arith.constant 0 : index
    %c0_9 = arith.constant 0 : index
    %7 = vector.load %arg6[%c0_7, %c0_8, %c0_9] : memref<1x22x88xf32, #tpu.memory_space<vmem>>, vector<1x3x88xf32>
    tpu.vector_store %arg6[%c0_7, %c0_8, %c0_9], %5 {strides = array<i32>} : memref<1x22x88xf32, #tpu.memory_space<vmem>>, vector<1x3x88xf32>,
    %c0_10 = arith.constant 0 : index
    %c19 = arith.constant 19 : index
    %c0_11 = arith.constant 0 : index
    %8 = vector.load %arg6[%c0_10, %c19, %c0_11] : memref<1x22x88xf32, #tpu.memory_space<vmem>>, vector<1x3x88xf32>
    tpu.vector_store %arg6[%c0_10, %c19, %c0_11], %5 {strides = array<i32>} : memref<1x22x88xf32, #tpu.memory_space<vmem>>, vector<1x3x88xf32>,
    %c0_12 = arith.constant 0 : index
    %c3 = arith.constant 3 : index
    %c0_13 = arith.constant 0 : index
    %9 = vector.load %arg6[%c0_12, %c3, %c0_13] : memref<1x22x88xf32, #tpu.memory_space<vmem>>, vector<1x16x12xf32>
    tpu.vector_store %arg6[%c0_12, %c3, %c0_13], %6 {strides = array<i32>} : memref<1x22x88xf32, #tpu.memory_space<vmem>>, vector<1x16x12xf32>,
    %c0_14 = arith.constant 0 : index
    %c3_15 = arith.constant 3 : index
    %c76 = arith.constant 76 : index
    %10 = vector.load %arg6[%c0_14, %c3_15, %c76] : memref<1x22x88xf32, #tpu.memory_space<vmem>>, vector<1x16x12xf32>
    tpu.vector_store %arg6[%c0_14, %c3_15, %c76], %6 {strides = array<i32>} : memref<1x22x88xf32, #tpu.memory_space<vmem>>, vector<1x16x12xf32>,
    %c0_16 = arith.constant 0 : index
    %c3_17 = arith.constant 3 : index
    %c12 = arith.constant 12 : index
    %11 = vector.load %arg6[%c0_16, %c3_17, %c12] : memref<1x22x88xf32, #tpu.memory_space<vmem>>, vector<1x16x64xf32>
    tpu.vector_store %arg6[%c0_16, %c3_17, %c12], %1 {strides = array<i32>} : memref<1x22x88xf32, #tpu.memory_space<vmem>>, vector<1x16x64xf32>,
    %c0_18 = arith.constant 0 : index
    %c0_19 = arith.constant 0 : index
    %c0_20 = arith.constant 0 : index
    %12 = vector.load %arg7[%c0_18, %c0_19, %c0_20] : memref<1x22x88xf32, #tpu.memory_space<vmem>>, vector<1x3x88xf32>
    tpu.vector_store %arg7[%c0_18, %c0_19, %c0_20], %5 {strides = array<i32>} : memref<1x22x88xf32, #tpu.memory_space<vmem>>, vector<1x3x88xf32>,
    %c0_21 = arith.constant 0 : index
    %c19_22 = arith.constant 19 : index
    %c0_23 = arith.constant 0 : index
    %13 = vector.load %arg7[%c0_21, %c19_22, %c0_23] : memref<1x22x88xf32, #tpu.memory_space<vmem>>, vector<1x3x88xf32>
    tpu.vector_store %arg7[%c0_21, %c19_22, %c0_23], %5 {strides = array<i32>} : memref<1x22x88xf32, #tpu.memory_space<vmem>>, vector<1x3x88xf32>,
    %c0_24 = arith.constant 0 : index
    %c3_25 = arith.constant 3 : index
    %c0_26 = arith.constant 0 : index
    %14 = vector.load %arg7[%c0_24, %c3_25, %c0_26] : memref<1x22x88xf32, #tpu.memory_space<vmem>>, vector<1x16x12xf32>
    tpu.vector_store %arg7[%c0_24, %c3_25, %c0_26], %6 {strides = array<i32>} : memref<1x22x88xf32, #tpu.memory_space<vmem>>, vector<1x16x12xf32>,
    %c0_27 = arith.constant 0 : index
    %c3_28 = arith.constant 3 : index
    %c76_29 = arith.constant 76 : index
    %15 = vector.load %arg7[%c0_27, %c3_28, %c76_29] : memref<1x22x88xf32, #tpu.memory_space<vmem>>, vector<1x16x12xf32>
    tpu.vector_store %arg7[%c0_27, %c3_28, %c76_29], %6 {strides = array<i32>} : memref<1x22x88xf32, #tpu.memory_space<vmem>>, vector<1x16x12xf32>,
    %c0_30 = arith.constant 0 : index
    %c3_31 = arith.constant 3 : index
    %c12_32 = arith.constant 12 : index
    %16 = vector.load %arg7[%c0_30, %c3_31, %c12_32] : memref<1x22x88xf32, #tpu.memory_space<vmem>>, vector<1x16x64xf32>
    tpu.vector_store %arg7[%c0_30, %c3_31, %c12_32], %4 {strides = array<i32>} : memref<1x22x88xf32, #tpu.memory_space<vmem>>, vector<1x16x64xf32>,
    %c0_33 = arith.constant 0 : index
    %c0_34 = arith.constant 0 : index
    %c0_35 = arith.constant 0 : index
    %17 = vector.load %arg6[%c0_33, %c0_34, %c0_35] : memref<1x22x88xf32, #tpu.memory_space<vmem>>, vector<1x16x88xf32>
    %c0_36 = arith.constant 0 : index
    %18 = memref.load %arg1[%c0_36] : memref<98xf32, #tpu.memory_space<smem>>
    %19 = vector.extract_strided_slice %17 {offsets = [0, 0, 0], sizes = [1, 16, 64], strides = [1, 1, 1]} : vector<1x16x88xf32> to vector<1x16x64xf32>
    %20 = vector.broadcast %18 : f32 to vector<1x16x64xf32>
    %21 = arith.mulf %20, %19 : vector<1x16x64xf32>
    %c1 = arith.constant 1 : index
    %22 = memref.load %arg1[%c1] : memref<98xf32, #tpu.memory_space<smem>>
    %23 = vector.extract_strided_slice %17 {offsets = [0, 0, 4], sizes = [1, 16, 64], strides = [1, 1, 1]} : vector<1x16x88xf32> to vector<1x16x64xf32>
    %24 = vector.broadcast %22 : f32 to vector<1x16x64xf32>
    %25 = arith.mulf %24, %23 : vector<1x16x64xf32>
    %26 = arith.addf %21, %25 : vector<1x16x64xf32>
    %c2 = arith.constant 2 : index
    %27 = memref.load %arg1[%c2] : memref<98xf32, #tpu.memory_space<smem>>
    %28 = vector.extract_strided_slice %17 {offsets = [0, 0, 8], sizes = [1, 16, 64], strides = [1, 1, 1]} : vector<1x16x88xf32> to vector<1x16x64xf32>
    %29 = vector.broadcast %27 : f32 to vector<1x16x64xf32>
    %30 = arith.mulf %29, %28 : vector<1x16x64xf32>
    %31 = arith.addf %26, %30 : vector<1x16x64xf32>
    %c3_37 = arith.constant 3 : index
    %32 = memref.load %arg1[%c3_37] : memref<98xf32, #tpu.memory_space<smem>>
    %33 = vector.extract_strided_slice %17 {offsets = [0, 0, 12], sizes = [1, 16, 64], strides = [1, 1, 1]} : vector<1x16x88xf32> to vector<1x16x64xf32>
    %34 = vector.broadcast %32 : f32 to vector<1x16x64xf32>
    %35 = arith.mulf %34, %33 : vector<1x16x64xf32>
    %36 = arith.addf %31, %35 : vector<1x16x64xf32>
    %c4 = arith.constant 4 : index
    %37 = memref.load %arg1[%c4] : memref<98xf32, #tpu.memory_space<smem>>
    %38 = vector.extract_strided_slice %17 {offsets = [0, 0, 16], sizes = [1, 16, 64], strides = [1, 1, 1]} : vector<1x16x88xf32> to vector<1x16x64xf32>
    %39 = vector.broadcast %37 : f32 to vector<1x16x64xf32>
    %40 = arith.mulf %39, %38 : vector<1x16x64xf32>
    %41 = arith.addf %36, %40 : vector<1x16x64xf32>
    %c5 = arith.constant 5 : index
    %42 = memref.load %arg1[%c5] : memref<98xf32, #tpu.memory_space<smem>>
    %43 = vector.extract_strided_slice %17 {offsets = [0, 0, 20], sizes = [1, 16, 64], strides = [1, 1, 1]} : vector<1x16x88xf32> to vector<1x16x64xf32>
    %44 = vector.broadcast %42 : f32 to vector<1x16x64xf32>
    %45 = arith.mulf %44, %43 : vector<1x16x64xf32>
    %46 = arith.addf %41, %45 : vector<1x16x64xf32>
    %c6 = arith.constant 6 : index
    %47 = memref.load %arg1[%c6] : memref<98xf32, #tpu.memory_space<smem>>
    %48 = vector.extract_strided_slice %17 {offsets = [0, 0, 24], sizes = [1, 16, 64], strides = [1, 1, 1]} : vector<1x16x88xf32> to vector<1x16x64xf32>
    %49 = vector.broadcast %47 : f32 to vector<1x16x64xf32>
    %50 = arith.mulf %49, %48 : vector<1x16x64xf32>
    %51 = arith.addf %46, %50 : vector<1x16x64xf32>
    %c0_38 = arith.constant 0 : index
    %c1_39 = arith.constant 1 : index
    %c0_40 = arith.constant 0 : index
    %52 = vector.load %arg6[%c0_38, %c1_39, %c0_40] : memref<1x22x88xf32, #tpu.memory_space<vmem>>, vector<1x16x88xf32>
    %c7 = arith.constant 7 : index
    %53 = memref.load %arg1[%c7] : memref<98xf32, #tpu.memory_space<smem>>
    %54 = vector.extract_strided_slice %52 {offsets = [0, 0, 0], sizes = [1, 16, 64], strides = [1, 1, 1]} : vector<1x16x88xf32> to vector<1x16x64xf32>
    %55 = vector.broadcast %53 : f32 to vector<1x16x64xf32>
    %56 = arith.mulf %55, %54 : vector<1x16x64xf32>
    %57 = arith.addf %51, %56 : vector<1x16x64xf32>
    %c8 = arith.constant 8 : index
    %58 = memref.load %arg1[%c8] : memref<98xf32, #tpu.memory_space<smem>>
    %59 = vector.extract_strided_slice %52 {offsets = [0, 0, 4], sizes = [1, 16, 64], strides = [1, 1, 1]} : vector<1x16x88xf32> to vector<1x16x64xf32>
    %60 = vector.broadcast %58 : f32 to vector<1x16x64xf32>
    %61 = arith.mulf %60, %59 : vector<1x16x64xf32>
    %62 = arith.addf %57, %61 : vector<1x16x64xf32>
    %c9 = arith.constant 9 : index
    %63 = memref.load %arg1[%c9] : memref<98xf32, #tpu.memory_space<smem>>
    %64 = vector.extract_strided_slice %52 {offsets = [0, 0, 8], sizes = [1, 16, 64], strides = [1, 1, 1]} : vector<1x16x88xf32> to vector<1x16x64xf32>
    %65 = vector.broadcast %63 : f32 to vector<1x16x64xf32>
    %66 = arith.mulf %65, %64 : vector<1x16x64xf32>
    %67 = arith.addf %62, %66 : vector<1x16x64xf32>
    %c10 = arith.constant 10 : index
    %68 = memref.load %arg1[%c10] : memref<98xf32, #tpu.memory_space<smem>>
    %69 = vector.extract_strided_slice %52 {offsets = [0, 0, 12], sizes = [1, 16, 64], strides = [1, 1, 1]} : vector<1x16x88xf32> to vector<1x16x64xf32>
    %70 = vector.broadcast %68 : f32 to vector<1x16x64xf32>
    %71 = arith.mulf %70, %69 : vector<1x16x64xf32>
    %72 = arith.addf %67, %71 : vector<1x16x64xf32>
    %c11 = arith.constant 11 : index
    %73 = memref.load %arg1[%c11] : memref<98xf32, #tpu.memory_space<smem>>
    %74 = vector.extract_strided_slice %52 {offsets = [0, 0, 16], sizes = [1, 16, 64], strides = [1, 1, 1]} : vector<1x16x88xf32> to vector<1x16x64xf32>
    %75 = vector.broadcast %73 : f32 to vector<1x16x64xf32>
    %76 = arith.mulf %75, %74 : vector<1x16x64xf32>
    %77 = arith.addf %72, %76 : vector<1x16x64xf32>
    %c12_41 = arith.constant 12 : index
    %78 = memref.load %arg1[%c12_41] : memref<98xf32, #tpu.memory_space<smem>>
    %79 = vector.extract_strided_slice %52 {offsets = [0, 0, 20], sizes = [1, 16, 64], strides = [1, 1, 1]} : vector<1x16x88xf32> to vector<1x16x64xf32>
    %80 = vector.broadcast %78 : f32 to vector<1x16x64xf32>
    %81 = arith.mulf %80, %79 : vector<1x16x64xf32>
    %82 = arith.addf %77, %81 : vector<1x16x64xf32>
    %c13 = arith.constant 13 : index
    %83 = memref.load %arg1[%c13] : memref<98xf32, #tpu.memory_space<smem>>
    %84 = vector.extract_strided_slice %52 {offsets = [0, 0, 24], sizes = [1, 16, 64], strides = [1, 1, 1]} : vector<1x16x88xf32> to vector<1x16x64xf32>
    %85 = vector.broadcast %83 : f32 to vector<1x16x64xf32>
    %86 = arith.mulf %85, %84 : vector<1x16x64xf32>
    %87 = arith.addf %82, %86 : vector<1x16x64xf32>
    %c0_42 = arith.constant 0 : index
    %c2_43 = arith.constant 2 : index
    %c0_44 = arith.constant 0 : index
    %88 = vector.load %arg6[%c0_42, %c2_43, %c0_44] : memref<1x22x88xf32, #tpu.memory_space<vmem>>, vector<1x16x88xf32>
    %c14 = arith.constant 14 : index
    %89 = memref.load %arg1[%c14] : memref<98xf32, #tpu.memory_space<smem>>
    %90 = vector.extract_strided_slice %88 {offsets = [0, 0, 0], sizes = [1, 16, 64], strides = [1, 1, 1]} : vector<1x16x88xf32> to vector<1x16x64xf32>
    %91 = vector.broadcast %89 : f32 to vector<1x16x64xf32>
    %92 = arith.mulf %91, %90 : vector<1x16x64xf32>
    %93 = arith.addf %87, %92 : vector<1x16x64xf32>
    %c15 = arith.constant 15 : index
    %94 = memref.load %arg1[%c15] : memref<98xf32, #tpu.memory_space<smem>>
    %95 = vector.extract_strided_slice %88 {offsets = [0, 0, 4], sizes = [1, 16, 64], strides = [1, 1, 1]} : vector<1x16x88xf32> to vector<1x16x64xf32>
    %96 = vector.broadcast %94 : f32 to vector<1x16x64xf32>
    %97 = arith.mulf %96, %95 : vector<1x16x64xf32>
    %98 = arith.addf %93, %97 : vector<1x16x64xf32>
    %c16 = arith.constant 16 : index
    %99 = memref.load %arg1[%c16] : memref<98xf32, #tpu.memory_space<smem>>
    %100 = vector.extract_strided_slice %88 {offsets = [0, 0, 8], sizes = [1, 16, 64], strides = [1, 1, 1]} : vector<1x16x88xf32> to vector<1x16x64xf32>
    %101 = vector.broadcast %99 : f32 to vector<1x16x64xf32>
    %102 = arith.mulf %101, %100 : vector<1x16x64xf32>
    %103 = arith.addf %98, %102 : vector<1x16x64xf32>
    %c17 = arith.constant 17 : index
    %104 = memref.load %arg1[%c17] : memref<98xf32, #tpu.memory_space<smem>>
    %105 = vector.extract_strided_slice %88 {offsets = [0, 0, 12], sizes = [1, 16, 64], strides = [1, 1, 1]} : vector<1x16x88xf32> to vector<1x16x64xf32>
    %106 = vector.broadcast %104 : f32 to vector<1x16x64xf32>
    %107 = arith.mulf %106, %105 : vector<1x16x64xf32>
    %108 = arith.addf %103, %107 : vector<1x16x64xf32>
    %c18 = arith.constant 18 : index
    %109 = memref.load %arg1[%c18] : memref<98xf32, #tpu.memory_space<smem>>
    %110 = vector.extract_strided_slice %88 {offsets = [0, 0, 16], sizes = [1, 16, 64], strides = [1, 1, 1]} : vector<1x16x88xf32> to vector<1x16x64xf32>
    %111 = vector.broadcast %109 : f32 to vector<1x16x64xf32>
    %112 = arith.mulf %111, %110 : vector<1x16x64xf32>
    %113 = arith.addf %108, %112 : vector<1x16x64xf32>
    %c19_45 = arith.constant 19 : index
    %114 = memref.load %arg1[%c19_45] : memref<98xf32, #tpu.memory_space<smem>>
    %115 = vector.extract_strided_slice %88 {offsets = [0, 0, 20], sizes = [1, 16, 64], strides = [1, 1, 1]} : vector<1x16x88xf32> to vector<1x16x64xf32>
    %116 = vector.broadcast %114 : f32 to vector<1x16x64xf32>
    %117 = arith.mulf %116, %115 : vector<1x16x64xf32>
    %118 = arith.addf %113, %117 : vector<1x16x64xf32>
    %c20 = arith.constant 20 : index
    %119 = memref.load %arg1[%c20] : memref<98xf32, #tpu.memory_space<smem>>
    %120 = vector.extract_strided_slice %88 {offsets = [0, 0, 24], sizes = [1, 16, 64], strides = [1, 1, 1]} : vector<1x16x88xf32> to vector<1x16x64xf32>
    %121 = vector.broadcast %119 : f32 to vector<1x16x64xf32>
    %122 = arith.mulf %121, %120 : vector<1x16x64xf32>
    %123 = arith.addf %118, %122 : vector<1x16x64xf32>
    %c0_46 = arith.constant 0 : index
    %c3_47 = arith.constant 3 : index
    %c0_48 = arith.constant 0 : index
    %124 = vector.load %arg6[%c0_46, %c3_47, %c0_48] : memref<1x22x88xf32, #tpu.memory_space<vmem>>, vector<1x16x88xf32>
    %c21 = arith.constant 21 : index
    %125 = memref.load %arg1[%c21] : memref<98xf32, #tpu.memory_space<smem>>
    %126 = vector.extract_strided_slice %124 {offsets = [0, 0, 0], sizes = [1, 16, 64], strides = [1, 1, 1]} : vector<1x16x88xf32> to vector<1x16x64xf32>
    %127 = vector.broadcast %125 : f32 to vector<1x16x64xf32>
    %128 = arith.mulf %127, %126 : vector<1x16x64xf32>
    %129 = arith.addf %123, %128 : vector<1x16x64xf32>
    %c22 = arith.constant 22 : index
    %130 = memref.load %arg1[%c22] : memref<98xf32, #tpu.memory_space<smem>>
    %131 = vector.extract_strided_slice %124 {offsets = [0, 0, 4], sizes = [1, 16, 64], strides = [1, 1, 1]} : vector<1x16x88xf32> to vector<1x16x64xf32>
    %132 = vector.broadcast %130 : f32 to vector<1x16x64xf32>
    %133 = arith.mulf %132, %131 : vector<1x16x64xf32>
    %134 = arith.addf %129, %133 : vector<1x16x64xf32>
    %c23 = arith.constant 23 : index
    %135 = memref.load %arg1[%c23] : memref<98xf32, #tpu.memory_space<smem>>
    %136 = vector.extract_strided_slice %124 {offsets = [0, 0, 8], sizes = [1, 16, 64], strides = [1, 1, 1]} : vector<1x16x88xf32> to vector<1x16x64xf32>
    %137 = vector.broadcast %135 : f32 to vector<1x16x64xf32>
    %138 = arith.mulf %137, %136 : vector<1x16x64xf32>
    %139 = arith.addf %134, %138 : vector<1x16x64xf32>
    %c24 = arith.constant 24 : index
    %140 = memref.load %arg1[%c24] : memref<98xf32, #tpu.memory_space<smem>>
    %141 = vector.extract_strided_slice %124 {offsets = [0, 0, 12], sizes = [1, 16, 64], strides = [1, 1, 1]} : vector<1x16x88xf32> to vector<1x16x64xf32>
    %142 = vector.broadcast %140 : f32 to vector<1x16x64xf32>
    %143 = arith.mulf %142, %141 : vector<1x16x64xf32>
    %144 = arith.addf %139, %143 : vector<1x16x64xf32>
    %c25 = arith.constant 25 : index
    %145 = memref.load %arg1[%c25] : memref<98xf32, #tpu.memory_space<smem>>
    %146 = vector.extract_strided_slice %124 {offsets = [0, 0, 16], sizes = [1, 16, 64], strides = [1, 1, 1]} : vector<1x16x88xf32> to vector<1x16x64xf32>
    %147 = vector.broadcast %145 : f32 to vector<1x16x64xf32>
    %148 = arith.mulf %147, %146 : vector<1x16x64xf32>
    %149 = arith.addf %144, %148 : vector<1x16x64xf32>
    %c26 = arith.constant 26 : index
    %150 = memref.load %arg1[%c26] : memref<98xf32, #tpu.memory_space<smem>>
    %151 = vector.extract_strided_slice %124 {offsets = [0, 0, 20], sizes = [1, 16, 64], strides = [1, 1, 1]} : vector<1x16x88xf32> to vector<1x16x64xf32>
    %152 = vector.broadcast %150 : f32 to vector<1x16x64xf32>
    %153 = arith.mulf %152, %151 : vector<1x16x64xf32>
    %154 = arith.addf %149, %153 : vector<1x16x64xf32>
    %c27 = arith.constant 27 : index
    %155 = memref.load %arg1[%c27] : memref<98xf32, #tpu.memory_space<smem>>
    %156 = vector.extract_strided_slice %124 {offsets = [0, 0, 24], sizes = [1, 16, 64], strides = [1, 1, 1]} : vector<1x16x88xf32> to vector<1x16x64xf32>
    %157 = vector.broadcast %155 : f32 to vector<1x16x64xf32>
    %158 = arith.mulf %157, %156 : vector<1x16x64xf32>
    %159 = arith.addf %154, %158 : vector<1x16x64xf32>
    %c0_49 = arith.constant 0 : index
    %c4_50 = arith.constant 4 : index
    %c0_51 = arith.constant 0 : index
    %160 = vector.load %arg6[%c0_49, %c4_50, %c0_51] : memref<1x22x88xf32, #tpu.memory_space<vmem>>, vector<1x16x88xf32>
    %c28 = arith.constant 28 : index
    %161 = memref.load %arg1[%c28] : memref<98xf32, #tpu.memory_space<smem>>
    %162 = vector.extract_strided_slice %160 {offsets = [0, 0, 0], sizes = [1, 16, 64], strides = [1, 1, 1]} : vector<1x16x88xf32> to vector<1x16x64xf32>
    %163 = vector.broadcast %161 : f32 to vector<1x16x64xf32>
    %164 = arith.mulf %163, %162 : vector<1x16x64xf32>
    %c29 = arith.constant 29 : index
    %165 = memref.load %arg1[%c29] : memref<98xf32, #tpu.memory_space<smem>>
    %166 = vector.extract_strided_slice %160 {offsets = [0, 0, 4], sizes = [1, 16, 64], strides = [1, 1, 1]} : vector<1x16x88xf32> to vector<1x16x64xf32>
    %167 = vector.broadcast %165 : f32 to vector<1x16x64xf32>
    %168 = arith.mulf %167, %166 : vector<1x16x64xf32>
    %169 = arith.addf %164, %168 : vector<1x16x64xf32>
    %c30 = arith.constant 30 : index
    %170 = memref.load %arg1[%c30] : memref<98xf32, #tpu.memory_space<smem>>
    %171 = vector.extract_strided_slice %160 {offsets = [0, 0, 8], sizes = [1, 16, 64], strides = [1, 1, 1]} : vector<1x16x88xf32> to vector<1x16x64xf32>
    %172 = vector.broadcast %170 : f32 to vector<1x16x64xf32>
    %173 = arith.mulf %172, %171 : vector<1x16x64xf32>
    %174 = arith.addf %169, %173 : vector<1x16x64xf32>
    %c31 = arith.constant 31 : index
    %175 = memref.load %arg1[%c31] : memref<98xf32, #tpu.memory_space<smem>>
    %176 = vector.extract_strided_slice %160 {offsets = [0, 0, 12], sizes = [1, 16, 64], strides = [1, 1, 1]} : vector<1x16x88xf32> to vector<1x16x64xf32>
    %177 = vector.broadcast %175 : f32 to vector<1x16x64xf32>
    %178 = arith.mulf %177, %176 : vector<1x16x64xf32>
    %179 = arith.addf %174, %178 : vector<1x16x64xf32>
    %c32 = arith.constant 32 : index
    %180 = memref.load %arg1[%c32] : memref<98xf32, #tpu.memory_space<smem>>
    %181 = vector.extract_strided_slice %160 {offsets = [0, 0, 16], sizes = [1, 16, 64], strides = [1, 1, 1]} : vector<1x16x88xf32> to vector<1x16x64xf32>
    %182 = vector.broadcast %180 : f32 to vector<1x16x64xf32>
    %183 = arith.mulf %182, %181 : vector<1x16x64xf32>
    %184 = arith.addf %179, %183 : vector<1x16x64xf32>
    %c33 = arith.constant 33 : index
    %185 = memref.load %arg1[%c33] : memref<98xf32, #tpu.memory_space<smem>>
    %186 = vector.extract_strided_slice %160 {offsets = [0, 0, 20], sizes = [1, 16, 64], strides = [1, 1, 1]} : vector<1x16x88xf32> to vector<1x16x64xf32>
    %187 = vector.broadcast %185 : f32 to vector<1x16x64xf32>
    %188 = arith.mulf %187, %186 : vector<1x16x64xf32>
    %189 = arith.addf %184, %188 : vector<1x16x64xf32>
    %c34 = arith.constant 34 : index
    %190 = memref.load %arg1[%c34] : memref<98xf32, #tpu.memory_space<smem>>
    %191 = vector.extract_strided_slice %160 {offsets = [0, 0, 24], sizes = [1, 16, 64], strides = [1, 1, 1]} : vector<1x16x88xf32> to vector<1x16x64xf32>
    %192 = vector.broadcast %190 : f32 to vector<1x16x64xf32>
    %193 = arith.mulf %192, %191 : vector<1x16x64xf32>
    %194 = arith.addf %189, %193 : vector<1x16x64xf32>
    %c0_52 = arith.constant 0 : index
    %c5_53 = arith.constant 5 : index
    %c0_54 = arith.constant 0 : index
    %195 = vector.load %arg6[%c0_52, %c5_53, %c0_54] : memref<1x22x88xf32, #tpu.memory_space<vmem>>, vector<1x16x88xf32>
    %c35 = arith.constant 35 : index
    %196 = memref.load %arg1[%c35] : memref<98xf32, #tpu.memory_space<smem>>
    %197 = vector.extract_strided_slice %195 {offsets = [0, 0, 0], sizes = [1, 16, 64], strides = [1, 1, 1]} : vector<1x16x88xf32> to vector<1x16x64xf32>
    %198 = vector.broadcast %196 : f32 to vector<1x16x64xf32>
    %199 = arith.mulf %198, %197 : vector<1x16x64xf32>
    %200 = arith.addf %194, %199 : vector<1x16x64xf32>
    %c36 = arith.constant 36 : index
    %201 = memref.load %arg1[%c36] : memref<98xf32, #tpu.memory_space<smem>>
    %202 = vector.extract_strided_slice %195 {offsets = [0, 0, 4], sizes = [1, 16, 64], strides = [1, 1, 1]} : vector<1x16x88xf32> to vector<1x16x64xf32>
    %203 = vector.broadcast %201 : f32 to vector<1x16x64xf32>
    %204 = arith.mulf %203, %202 : vector<1x16x64xf32>
    %205 = arith.addf %200, %204 : vector<1x16x64xf32>
    %c37 = arith.constant 37 : index
    %206 = memref.load %arg1[%c37] : memref<98xf32, #tpu.memory_space<smem>>
    %207 = vector.extract_strided_slice %195 {offsets = [0, 0, 8], sizes = [1, 16, 64], strides = [1, 1, 1]} : vector<1x16x88xf32> to vector<1x16x64xf32>
    %208 = vector.broadcast %206 : f32 to vector<1x16x64xf32>
    %209 = arith.mulf %208, %207 : vector<1x16x64xf32>
    %210 = arith.addf %205, %209 : vector<1x16x64xf32>
    %c38 = arith.constant 38 : index
    %211 = memref.load %arg1[%c38] : memref<98xf32, #tpu.memory_space<smem>>
    %212 = vector.extract_strided_slice %195 {offsets = [0, 0, 12], sizes = [1, 16, 64], strides = [1, 1, 1]} : vector<1x16x88xf32> to vector<1x16x64xf32>
    %213 = vector.broadcast %211 : f32 to vector<1x16x64xf32>
    %214 = arith.mulf %213, %212 : vector<1x16x64xf32>
    %215 = arith.addf %210, %214 : vector<1x16x64xf32>
    %c39 = arith.constant 39 : index
    %216 = memref.load %arg1[%c39] : memref<98xf32, #tpu.memory_space<smem>>
    %217 = vector.extract_strided_slice %195 {offsets = [0, 0, 16], sizes = [1, 16, 64], strides = [1, 1, 1]} : vector<1x16x88xf32> to vector<1x16x64xf32>
    %218 = vector.broadcast %216 : f32 to vector<1x16x64xf32>
    %219 = arith.mulf %218, %217 : vector<1x16x64xf32>
    %220 = arith.addf %215, %219 : vector<1x16x64xf32>
    %c40 = arith.constant 40 : index
    %221 = memref.load %arg1[%c40] : memref<98xf32, #tpu.memory_space<smem>>
    %222 = vector.extract_strided_slice %195 {offsets = [0, 0, 20], sizes = [1, 16, 64], strides = [1, 1, 1]} : vector<1x16x88xf32> to vector<1x16x64xf32>
    %223 = vector.broadcast %221 : f32 to vector<1x16x64xf32>
    %224 = arith.mulf %223, %222 : vector<1x16x64xf32>
    %225 = arith.addf %220, %224 : vector<1x16x64xf32>
    %c41 = arith.constant 41 : index
    %226 = memref.load %arg1[%c41] : memref<98xf32, #tpu.memory_space<smem>>
    %227 = vector.extract_strided_slice %195 {offsets = [0, 0, 24], sizes = [1, 16, 64], strides = [1, 1, 1]} : vector<1x16x88xf32> to vector<1x16x64xf32>
    %228 = vector.broadcast %226 : f32 to vector<1x16x64xf32>
    %229 = arith.mulf %228, %227 : vector<1x16x64xf32>
    %230 = arith.addf %225, %229 : vector<1x16x64xf32>
    %c0_55 = arith.constant 0 : index
    %c6_56 = arith.constant 6 : index
    %c0_57 = arith.constant 0 : index
    %231 = vector.load %arg6[%c0_55, %c6_56, %c0_57] : memref<1x22x88xf32, #tpu.memory_space<vmem>>, vector<1x16x88xf32>
    %c42 = arith.constant 42 : index
    %232 = memref.load %arg1[%c42] : memref<98xf32, #tpu.memory_space<smem>>
    %233 = vector.extract_strided_slice %231 {offsets = [0, 0, 0], sizes = [1, 16, 64], strides = [1, 1, 1]} : vector<1x16x88xf32> to vector<1x16x64xf32>
    %234 = vector.broadcast %232 : f32 to vector<1x16x64xf32>
    %235 = arith.mulf %234, %233 : vector<1x16x64xf32>
    %236 = arith.addf %230, %235 : vector<1x16x64xf32>
    %c43 = arith.constant 43 : index
    %237 = memref.load %arg1[%c43] : memref<98xf32, #tpu.memory_space<smem>>
    %238 = vector.extract_strided_slice %231 {offsets = [0, 0, 4], sizes = [1, 16, 64], strides = [1, 1, 1]} : vector<1x16x88xf32> to vector<1x16x64xf32>
    %239 = vector.broadcast %237 : f32 to vector<1x16x64xf32>
    %240 = arith.mulf %239, %238 : vector<1x16x64xf32>
    %241 = arith.addf %236, %240 : vector<1x16x64xf32>
    %c44 = arith.constant 44 : index
    %242 = memref.load %arg1[%c44] : memref<98xf32, #tpu.memory_space<smem>>
    %243 = vector.extract_strided_slice %231 {offsets = [0, 0, 8], sizes = [1, 16, 64], strides = [1, 1, 1]} : vector<1x16x88xf32> to vector<1x16x64xf32>
    %244 = vector.broadcast %242 : f32 to vector<1x16x64xf32>
    %245 = arith.mulf %244, %243 : vector<1x16x64xf32>
    %246 = arith.addf %241, %245 : vector<1x16x64xf32>
    %c45 = arith.constant 45 : index
    %247 = memref.load %arg1[%c45] : memref<98xf32, #tpu.memory_space<smem>>
    %248 = vector.extract_strided_slice %231 {offsets = [0, 0, 12], sizes = [1, 16, 64], strides = [1, 1, 1]} : vector<1x16x88xf32> to vector<1x16x64xf32>
    %249 = vector.broadcast %247 : f32 to vector<1x16x64xf32>
    %250 = arith.mulf %249, %248 : vector<1x16x64xf32>
    %251 = arith.addf %246, %250 : vector<1x16x64xf32>
    %c46 = arith.constant 46 : index
    %252 = memref.load %arg1[%c46] : memref<98xf32, #tpu.memory_space<smem>>
    %253 = vector.extract_strided_slice %231 {offsets = [0, 0, 16], sizes = [1, 16, 64], strides = [1, 1, 1]} : vector<1x16x88xf32> to vector<1x16x64xf32>
    %254 = vector.broadcast %252 : f32 to vector<1x16x64xf32>
    %255 = arith.mulf %254, %253 : vector<1x16x64xf32>
    %256 = arith.addf %251, %255 : vector<1x16x64xf32>
    %c47 = arith.constant 47 : index
    %257 = memref.load %arg1[%c47] : memref<98xf32, #tpu.memory_space<smem>>
    %258 = vector.extract_strided_slice %231 {offsets = [0, 0, 20], sizes = [1, 16, 64], strides = [1, 1, 1]} : vector<1x16x88xf32> to vector<1x16x64xf32>
    %259 = vector.broadcast %257 : f32 to vector<1x16x64xf32>
    %260 = arith.mulf %259, %258 : vector<1x16x64xf32>
    %261 = arith.addf %256, %260 : vector<1x16x64xf32>
    %c48 = arith.constant 48 : index
    %262 = memref.load %arg1[%c48] : memref<98xf32, #tpu.memory_space<smem>>
    %263 = vector.extract_strided_slice %231 {offsets = [0, 0, 24], sizes = [1, 16, 64], strides = [1, 1, 1]} : vector<1x16x88xf32> to vector<1x16x64xf32>
    %264 = vector.broadcast %262 : f32 to vector<1x16x64xf32>
    %265 = arith.mulf %264, %263 : vector<1x16x64xf32>
    %266 = arith.addf %261, %265 : vector<1x16x64xf32>
    %c0_58 = arith.constant 0 : index
    %c0_59 = arith.constant 0 : index
    %c0_60 = arith.constant 0 : index
    %267 = vector.load %arg7[%c0_58, %c0_59, %c0_60] : memref<1x22x88xf32, #tpu.memory_space<vmem>>, vector<1x16x88xf32>
    %c49 = arith.constant 49 : index
    %268 = memref.load %arg1[%c49] : memref<98xf32, #tpu.memory_space<smem>>
    %269 = vector.extract_strided_slice %267 {offsets = [0, 0, 0], sizes = [1, 16, 64], strides = [1, 1, 1]} : vector<1x16x88xf32> to vector<1x16x64xf32>
    %270 = vector.broadcast %268 : f32 to vector<1x16x64xf32>
    %271 = arith.mulf %270, %269 : vector<1x16x64xf32>
    %c50 = arith.constant 50 : index
    %272 = memref.load %arg1[%c50] : memref<98xf32, #tpu.memory_space<smem>>
    %273 = vector.extract_strided_slice %267 {offsets = [0, 0, 4], sizes = [1, 16, 64], strides = [1, 1, 1]} : vector<1x16x88xf32> to vector<1x16x64xf32>
    %274 = vector.broadcast %272 : f32 to vector<1x16x64xf32>
    %275 = arith.mulf %274, %273 : vector<1x16x64xf32>
    %276 = arith.addf %271, %275 : vector<1x16x64xf32>
    %c51 = arith.constant 51 : index
    %277 = memref.load %arg1[%c51] : memref<98xf32, #tpu.memory_space<smem>>
    %278 = vector.extract_strided_slice %267 {offsets = [0, 0, 8], sizes = [1, 16, 64], strides = [1, 1, 1]} : vector<1x16x88xf32> to vector<1x16x64xf32>
    %279 = vector.broadcast %277 : f32 to vector<1x16x64xf32>
    %280 = arith.mulf %279, %278 : vector<1x16x64xf32>
    %281 = arith.addf %276, %280 : vector<1x16x64xf32>
    %c52 = arith.constant 52 : index
    %282 = memref.load %arg1[%c52] : memref<98xf32, #tpu.memory_space<smem>>
    %283 = vector.extract_strided_slice %267 {offsets = [0, 0, 12], sizes = [1, 16, 64], strides = [1, 1, 1]} : vector<1x16x88xf32> to vector<1x16x64xf32>
    %284 = vector.broadcast %282 : f32 to vector<1x16x64xf32>
    %285 = arith.mulf %284, %283 : vector<1x16x64xf32>
    %286 = arith.addf %281, %285 : vector<1x16x64xf32>
    %c53 = arith.constant 53 : index
    %287 = memref.load %arg1[%c53] : memref<98xf32, #tpu.memory_space<smem>>
    %288 = vector.extract_strided_slice %267 {offsets = [0, 0, 16], sizes = [1, 16, 64], strides = [1, 1, 1]} : vector<1x16x88xf32> to vector<1x16x64xf32>
    %289 = vector.broadcast %287 : f32 to vector<1x16x64xf32>
    %290 = arith.mulf %289, %288 : vector<1x16x64xf32>
    %291 = arith.addf %286, %290 : vector<1x16x64xf32>
    %c54 = arith.constant 54 : index
    %292 = memref.load %arg1[%c54] : memref<98xf32, #tpu.memory_space<smem>>
    %293 = vector.extract_strided_slice %267 {offsets = [0, 0, 20], sizes = [1, 16, 64], strides = [1, 1, 1]} : vector<1x16x88xf32> to vector<1x16x64xf32>
    %294 = vector.broadcast %292 : f32 to vector<1x16x64xf32>
    %295 = arith.mulf %294, %293 : vector<1x16x64xf32>
    %296 = arith.addf %291, %295 : vector<1x16x64xf32>
    %c55 = arith.constant 55 : index
    %297 = memref.load %arg1[%c55] : memref<98xf32, #tpu.memory_space<smem>>
    %298 = vector.extract_strided_slice %267 {offsets = [0, 0, 24], sizes = [1, 16, 64], strides = [1, 1, 1]} : vector<1x16x88xf32> to vector<1x16x64xf32>
    %299 = vector.broadcast %297 : f32 to vector<1x16x64xf32>
    %300 = arith.mulf %299, %298 : vector<1x16x64xf32>
    %301 = arith.addf %296, %300 : vector<1x16x64xf32>
    %c0_61 = arith.constant 0 : index
    %c1_62 = arith.constant 1 : index
    %c0_63 = arith.constant 0 : index
    %302 = vector.load %arg7[%c0_61, %c1_62, %c0_63] : memref<1x22x88xf32, #tpu.memory_space<vmem>>, vector<1x16x88xf32>
    %c56 = arith.constant 56 : index
    %303 = memref.load %arg1[%c56] : memref<98xf32, #tpu.memory_space<smem>>
    %304 = vector.extract_strided_slice %302 {offsets = [0, 0, 0], sizes = [1, 16, 64], strides = [1, 1, 1]} : vector<1x16x88xf32> to vector<1x16x64xf32>
    %305 = vector.broadcast %303 : f32 to vector<1x16x64xf32>
    %306 = arith.mulf %305, %304 : vector<1x16x64xf32>
    %307 = arith.addf %301, %306 : vector<1x16x64xf32>
    %c57 = arith.constant 57 : index
    %308 = memref.load %arg1[%c57] : memref<98xf32, #tpu.memory_space<smem>>
    %309 = vector.extract_strided_slice %302 {offsets = [0, 0, 4], sizes = [1, 16, 64], strides = [1, 1, 1]} : vector<1x16x88xf32> to vector<1x16x64xf32>
    %310 = vector.broadcast %308 : f32 to vector<1x16x64xf32>
    %311 = arith.mulf %310, %309 : vector<1x16x64xf32>
    %312 = arith.addf %307, %311 : vector<1x16x64xf32>
    %c58 = arith.constant 58 : index
    %313 = memref.load %arg1[%c58] : memref<98xf32, #tpu.memory_space<smem>>
    %314 = vector.extract_strided_slice %302 {offsets = [0, 0, 8], sizes = [1, 16, 64], strides = [1, 1, 1]} : vector<1x16x88xf32> to vector<1x16x64xf32>
    %315 = vector.broadcast %313 : f32 to vector<1x16x64xf32>
    %316 = arith.mulf %315, %314 : vector<1x16x64xf32>
    %317 = arith.addf %312, %316 : vector<1x16x64xf32>
    %c59 = arith.constant 59 : index
    %318 = memref.load %arg1[%c59] : memref<98xf32, #tpu.memory_space<smem>>
    %319 = vector.extract_strided_slice %302 {offsets = [0, 0, 12], sizes = [1, 16, 64], strides = [1, 1, 1]} : vector<1x16x88xf32> to vector<1x16x64xf32>
    %320 = vector.broadcast %318 : f32 to vector<1x16x64xf32>
    %321 = arith.mulf %320, %319 : vector<1x16x64xf32>
    %322 = arith.addf %317, %321 : vector<1x16x64xf32>
    %c60 = arith.constant 60 : index
    %323 = memref.load %arg1[%c60] : memref<98xf32, #tpu.memory_space<smem>>
    %324 = vector.extract_strided_slice %302 {offsets = [0, 0, 16], sizes = [1, 16, 64], strides = [1, 1, 1]} : vector<1x16x88xf32> to vector<1x16x64xf32>
    %325 = vector.broadcast %323 : f32 to vector<1x16x64xf32>
    %326 = arith.mulf %325, %324 : vector<1x16x64xf32>
    %327 = arith.addf %322, %326 : vector<1x16x64xf32>
    %c61 = arith.constant 61 : index
    %328 = memref.load %arg1[%c61] : memref<98xf32, #tpu.memory_space<smem>>
    %329 = vector.extract_strided_slice %302 {offsets = [0, 0, 20], sizes = [1, 16, 64], strides = [1, 1, 1]} : vector<1x16x88xf32> to vector<1x16x64xf32>
    %330 = vector.broadcast %328 : f32 to vector<1x16x64xf32>
    %331 = arith.mulf %330, %329 : vector<1x16x64xf32>
    %332 = arith.addf %327, %331 : vector<1x16x64xf32>
    %c62 = arith.constant 62 : index
    %333 = memref.load %arg1[%c62] : memref<98xf32, #tpu.memory_space<smem>>
    %334 = vector.extract_strided_slice %302 {offsets = [0, 0, 24], sizes = [1, 16, 64], strides = [1, 1, 1]} : vector<1x16x88xf32> to vector<1x16x64xf32>
    %335 = vector.broadcast %333 : f32 to vector<1x16x64xf32>
    %336 = arith.mulf %335, %334 : vector<1x16x64xf32>
    %337 = arith.addf %332, %336 : vector<1x16x64xf32>
    %c0_64 = arith.constant 0 : index
    %c2_65 = arith.constant 2 : index
    %c0_66 = arith.constant 0 : index
    %338 = vector.load %arg7[%c0_64, %c2_65, %c0_66] : memref<1x22x88xf32, #tpu.memory_space<vmem>>, vector<1x16x88xf32>
    %c63 = arith.constant 63 : index
    %339 = memref.load %arg1[%c63] : memref<98xf32, #tpu.memory_space<smem>>
    %340 = vector.extract_strided_slice %338 {offsets = [0, 0, 0], sizes = [1, 16, 64], strides = [1, 1, 1]} : vector<1x16x88xf32> to vector<1x16x64xf32>
    %341 = vector.broadcast %339 : f32 to vector<1x16x64xf32>
    %342 = arith.mulf %341, %340 : vector<1x16x64xf32>
    %343 = arith.addf %337, %342 : vector<1x16x64xf32>
    %c64 = arith.constant 64 : index
    %344 = memref.load %arg1[%c64] : memref<98xf32, #tpu.memory_space<smem>>
    %345 = vector.extract_strided_slice %338 {offsets = [0, 0, 4], sizes = [1, 16, 64], strides = [1, 1, 1]} : vector<1x16x88xf32> to vector<1x16x64xf32>
    %346 = vector.broadcast %344 : f32 to vector<1x16x64xf32>
    %347 = arith.mulf %346, %345 : vector<1x16x64xf32>
    %348 = arith.addf %343, %347 : vector<1x16x64xf32>
    %c65 = arith.constant 65 : index
    %349 = memref.load %arg1[%c65] : memref<98xf32, #tpu.memory_space<smem>>
    %350 = vector.extract_strided_slice %338 {offsets = [0, 0, 8], sizes = [1, 16, 64], strides = [1, 1, 1]} : vector<1x16x88xf32> to vector<1x16x64xf32>
    %351 = vector.broadcast %349 : f32 to vector<1x16x64xf32>
    %352 = arith.mulf %351, %350 : vector<1x16x64xf32>
    %353 = arith.addf %348, %352 : vector<1x16x64xf32>
    %c66 = arith.constant 66 : index
    %354 = memref.load %arg1[%c66] : memref<98xf32, #tpu.memory_space<smem>>
    %355 = vector.extract_strided_slice %338 {offsets = [0, 0, 12], sizes = [1, 16, 64], strides = [1, 1, 1]} : vector<1x16x88xf32> to vector<1x16x64xf32>
    %356 = vector.broadcast %354 : f32 to vector<1x16x64xf32>
    %357 = arith.mulf %356, %355 : vector<1x16x64xf32>
    %358 = arith.addf %353, %357 : vector<1x16x64xf32>
    %c67 = arith.constant 67 : index
    %359 = memref.load %arg1[%c67] : memref<98xf32, #tpu.memory_space<smem>>
    %360 = vector.extract_strided_slice %338 {offsets = [0, 0, 16], sizes = [1, 16, 64], strides = [1, 1, 1]} : vector<1x16x88xf32> to vector<1x16x64xf32>
    %361 = vector.broadcast %359 : f32 to vector<1x16x64xf32>
    %362 = arith.mulf %361, %360 : vector<1x16x64xf32>
    %363 = arith.addf %358, %362 : vector<1x16x64xf32>
    %c68 = arith.constant 68 : index
    %364 = memref.load %arg1[%c68] : memref<98xf32, #tpu.memory_space<smem>>
    %365 = vector.extract_strided_slice %338 {offsets = [0, 0, 20], sizes = [1, 16, 64], strides = [1, 1, 1]} : vector<1x16x88xf32> to vector<1x16x64xf32>
    %366 = vector.broadcast %364 : f32 to vector<1x16x64xf32>
    %367 = arith.mulf %366, %365 : vector<1x16x64xf32>
    %368 = arith.addf %363, %367 : vector<1x16x64xf32>
    %c69 = arith.constant 69 : index
    %369 = memref.load %arg1[%c69] : memref<98xf32, #tpu.memory_space<smem>>
    %370 = vector.extract_strided_slice %338 {offsets = [0, 0, 24], sizes = [1, 16, 64], strides = [1, 1, 1]} : vector<1x16x88xf32> to vector<1x16x64xf32>
    %371 = vector.broadcast %369 : f32 to vector<1x16x64xf32>
    %372 = arith.mulf %371, %370 : vector<1x16x64xf32>
    %373 = arith.addf %368, %372 : vector<1x16x64xf32>
    %c0_67 = arith.constant 0 : index
    %c3_68 = arith.constant 3 : index
    %c0_69 = arith.constant 0 : index
    %374 = vector.load %arg7[%c0_67, %c3_68, %c0_69] : memref<1x22x88xf32, #tpu.memory_space<vmem>>, vector<1x16x88xf32>
    %c70 = arith.constant 70 : index
    %375 = memref.load %arg1[%c70] : memref<98xf32, #tpu.memory_space<smem>>
    %376 = vector.extract_strided_slice %374 {offsets = [0, 0, 0], sizes = [1, 16, 64], strides = [1, 1, 1]} : vector<1x16x88xf32> to vector<1x16x64xf32>
    %377 = vector.broadcast %375 : f32 to vector<1x16x64xf32>
    %378 = arith.mulf %377, %376 : vector<1x16x64xf32>
    %379 = arith.addf %373, %378 : vector<1x16x64xf32>
    %c71 = arith.constant 71 : index
    %380 = memref.load %arg1[%c71] : memref<98xf32, #tpu.memory_space<smem>>
    %381 = vector.extract_strided_slice %374 {offsets = [0, 0, 4], sizes = [1, 16, 64], strides = [1, 1, 1]} : vector<1x16x88xf32> to vector<1x16x64xf32>
    %382 = vector.broadcast %380 : f32 to vector<1x16x64xf32>
    %383 = arith.mulf %382, %381 : vector<1x16x64xf32>
    %384 = arith.addf %379, %383 : vector<1x16x64xf32>
    %c72 = arith.constant 72 : index
    %385 = memref.load %arg1[%c72] : memref<98xf32, #tpu.memory_space<smem>>
    %386 = vector.extract_strided_slice %374 {offsets = [0, 0, 8], sizes = [1, 16, 64], strides = [1, 1, 1]} : vector<1x16x88xf32> to vector<1x16x64xf32>
    %387 = vector.broadcast %385 : f32 to vector<1x16x64xf32>
    %388 = arith.mulf %387, %386 : vector<1x16x64xf32>
    %389 = arith.addf %384, %388 : vector<1x16x64xf32>
    %c73 = arith.constant 73 : index
    %390 = memref.load %arg1[%c73] : memref<98xf32, #tpu.memory_space<smem>>
    %391 = vector.extract_strided_slice %374 {offsets = [0, 0, 12], sizes = [1, 16, 64], strides = [1, 1, 1]} : vector<1x16x88xf32> to vector<1x16x64xf32>
    %392 = vector.broadcast %390 : f32 to vector<1x16x64xf32>
    %393 = arith.mulf %392, %391 : vector<1x16x64xf32>
    %394 = arith.addf %389, %393 : vector<1x16x64xf32>
    %c74 = arith.constant 74 : index
    %395 = memref.load %arg1[%c74] : memref<98xf32, #tpu.memory_space<smem>>
    %396 = vector.extract_strided_slice %374 {offsets = [0, 0, 16], sizes = [1, 16, 64], strides = [1, 1, 1]} : vector<1x16x88xf32> to vector<1x16x64xf32>
    %397 = vector.broadcast %395 : f32 to vector<1x16x64xf32>
    %398 = arith.mulf %397, %396 : vector<1x16x64xf32>
    %399 = arith.addf %394, %398 : vector<1x16x64xf32>
    %c75 = arith.constant 75 : index
    %400 = memref.load %arg1[%c75] : memref<98xf32, #tpu.memory_space<smem>>
    %401 = vector.extract_strided_slice %374 {offsets = [0, 0, 20], sizes = [1, 16, 64], strides = [1, 1, 1]} : vector<1x16x88xf32> to vector<1x16x64xf32>
    %402 = vector.broadcast %400 : f32 to vector<1x16x64xf32>
    %403 = arith.mulf %402, %401 : vector<1x16x64xf32>
    %404 = arith.addf %399, %403 : vector<1x16x64xf32>
    %c76_70 = arith.constant 76 : index
    %405 = memref.load %arg1[%c76_70] : memref<98xf32, #tpu.memory_space<smem>>
    %406 = vector.extract_strided_slice %374 {offsets = [0, 0, 24], sizes = [1, 16, 64], strides = [1, 1, 1]} : vector<1x16x88xf32> to vector<1x16x64xf32>
    %407 = vector.broadcast %405 : f32 to vector<1x16x64xf32>
    %408 = arith.mulf %407, %406 : vector<1x16x64xf32>
    %409 = arith.addf %404, %408 : vector<1x16x64xf32>
    %c0_71 = arith.constant 0 : index
    %c4_72 = arith.constant 4 : index
    %c0_73 = arith.constant 0 : index
    %410 = vector.load %arg7[%c0_71, %c4_72, %c0_73] : memref<1x22x88xf32, #tpu.memory_space<vmem>>, vector<1x16x88xf32>
    %c77 = arith.constant 77 : index
    %411 = memref.load %arg1[%c77] : memref<98xf32, #tpu.memory_space<smem>>
    %412 = vector.extract_strided_slice %410 {offsets = [0, 0, 0], sizes = [1, 16, 64], strides = [1, 1, 1]} : vector<1x16x88xf32> to vector<1x16x64xf32>
    %413 = vector.broadcast %411 : f32 to vector<1x16x64xf32>
    %414 = arith.mulf %413, %412 : vector<1x16x64xf32>
    %c78 = arith.constant 78 : index
    %415 = memref.load %arg1[%c78] : memref<98xf32, #tpu.memory_space<smem>>
    %416 = vector.extract_strided_slice %410 {offsets = [0, 0, 4], sizes = [1, 16, 64], strides = [1, 1, 1]} : vector<1x16x88xf32> to vector<1x16x64xf32>
    %417 = vector.broadcast %415 : f32 to vector<1x16x64xf32>
    %418 = arith.mulf %417, %416 : vector<1x16x64xf32>
    %419 = arith.addf %414, %418 : vector<1x16x64xf32>
    %c79 = arith.constant 79 : index
    %420 = memref.load %arg1[%c79] : memref<98xf32, #tpu.memory_space<smem>>
    %421 = vector.extract_strided_slice %410 {offsets = [0, 0, 8], sizes = [1, 16, 64], strides = [1, 1, 1]} : vector<1x16x88xf32> to vector<1x16x64xf32>
    %422 = vector.broadcast %420 : f32 to vector<1x16x64xf32>
    %423 = arith.mulf %422, %421 : vector<1x16x64xf32>
    %424 = arith.addf %419, %423 : vector<1x16x64xf32>
    %c80 = arith.constant 80 : index
    %425 = memref.load %arg1[%c80] : memref<98xf32, #tpu.memory_space<smem>>
    %426 = vector.extract_strided_slice %410 {offsets = [0, 0, 12], sizes = [1, 16, 64], strides = [1, 1, 1]} : vector<1x16x88xf32> to vector<1x16x64xf32>
    %427 = vector.broadcast %425 : f32 to vector<1x16x64xf32>
    %428 = arith.mulf %427, %426 : vector<1x16x64xf32>
    %429 = arith.addf %424, %428 : vector<1x16x64xf32>
    %c81 = arith.constant 81 : index
    %430 = memref.load %arg1[%c81] : memref<98xf32, #tpu.memory_space<smem>>
    %431 = vector.extract_strided_slice %410 {offsets = [0, 0, 16], sizes = [1, 16, 64], strides = [1, 1, 1]} : vector<1x16x88xf32> to vector<1x16x64xf32>
    %432 = vector.broadcast %430 : f32 to vector<1x16x64xf32>
    %433 = arith.mulf %432, %431 : vector<1x16x64xf32>
    %434 = arith.addf %429, %433 : vector<1x16x64xf32>
    %c82 = arith.constant 82 : index
    %435 = memref.load %arg1[%c82] : memref<98xf32, #tpu.memory_space<smem>>
    %436 = vector.extract_strided_slice %410 {offsets = [0, 0, 20], sizes = [1, 16, 64], strides = [1, 1, 1]} : vector<1x16x88xf32> to vector<1x16x64xf32>
    %437 = vector.broadcast %435 : f32 to vector<1x16x64xf32>
    %438 = arith.mulf %437, %436 : vector<1x16x64xf32>
    %439 = arith.addf %434, %438 : vector<1x16x64xf32>
    %c83 = arith.constant 83 : index
    %440 = memref.load %arg1[%c83] : memref<98xf32, #tpu.memory_space<smem>>
    %441 = vector.extract_strided_slice %410 {offsets = [0, 0, 24], sizes = [1, 16, 64], strides = [1, 1, 1]} : vector<1x16x88xf32> to vector<1x16x64xf32>
    %442 = vector.broadcast %440 : f32 to vector<1x16x64xf32>
    %443 = arith.mulf %442, %441 : vector<1x16x64xf32>
    %444 = arith.addf %439, %443 : vector<1x16x64xf32>
    %c0_74 = arith.constant 0 : index
    %c5_75 = arith.constant 5 : index
    %c0_76 = arith.constant 0 : index
    %445 = vector.load %arg7[%c0_74, %c5_75, %c0_76] : memref<1x22x88xf32, #tpu.memory_space<vmem>>, vector<1x16x88xf32>
    %c84 = arith.constant 84 : index
    %446 = memref.load %arg1[%c84] : memref<98xf32, #tpu.memory_space<smem>>
    %447 = vector.extract_strided_slice %445 {offsets = [0, 0, 0], sizes = [1, 16, 64], strides = [1, 1, 1]} : vector<1x16x88xf32> to vector<1x16x64xf32>
    %448 = vector.broadcast %446 : f32 to vector<1x16x64xf32>
    %449 = arith.mulf %448, %447 : vector<1x16x64xf32>
    %450 = arith.addf %444, %449 : vector<1x16x64xf32>
    %c85 = arith.constant 85 : index
    %451 = memref.load %arg1[%c85] : memref<98xf32, #tpu.memory_space<smem>>
    %452 = vector.extract_strided_slice %445 {offsets = [0, 0, 4], sizes = [1, 16, 64], strides = [1, 1, 1]} : vector<1x16x88xf32> to vector<1x16x64xf32>
    %453 = vector.broadcast %451 : f32 to vector<1x16x64xf32>
    %454 = arith.mulf %453, %452 : vector<1x16x64xf32>
    %455 = arith.addf %450, %454 : vector<1x16x64xf32>
    %c86 = arith.constant 86 : index
    %456 = memref.load %arg1[%c86] : memref<98xf32, #tpu.memory_space<smem>>
    %457 = vector.extract_strided_slice %445 {offsets = [0, 0, 8], sizes = [1, 16, 64], strides = [1, 1, 1]} : vector<1x16x88xf32> to vector<1x16x64xf32>
    %458 = vector.broadcast %456 : f32 to vector<1x16x64xf32>
    %459 = arith.mulf %458, %457 : vector<1x16x64xf32>
    %460 = arith.addf %455, %459 : vector<1x16x64xf32>
    %c87 = arith.constant 87 : index
    %461 = memref.load %arg1[%c87] : memref<98xf32, #tpu.memory_space<smem>>
    %462 = vector.extract_strided_slice %445 {offsets = [0, 0, 12], sizes = [1, 16, 64], strides = [1, 1, 1]} : vector<1x16x88xf32> to vector<1x16x64xf32>
    %463 = vector.broadcast %461 : f32 to vector<1x16x64xf32>
    %464 = arith.mulf %463, %462 : vector<1x16x64xf32>
    %465 = arith.addf %460, %464 : vector<1x16x64xf32>
    %c88 = arith.constant 88 : index
    %466 = memref.load %arg1[%c88] : memref<98xf32, #tpu.memory_space<smem>>
    %467 = vector.extract_strided_slice %445 {offsets = [0, 0, 16], sizes = [1, 16, 64], strides = [1, 1, 1]} : vector<1x16x88xf32> to vector<1x16x64xf32>
    %468 = vector.broadcast %466 : f32 to vector<1x16x64xf32>
    %469 = arith.mulf %468, %467 : vector<1x16x64xf32>
    %470 = arith.addf %465, %469 : vector<1x16x64xf32>
    %c89 = arith.constant 89 : index
    %471 = memref.load %arg1[%c89] : memref<98xf32, #tpu.memory_space<smem>>
    %472 = vector.extract_strided_slice %445 {offsets = [0, 0, 20], sizes = [1, 16, 64], strides = [1, 1, 1]} : vector<1x16x88xf32> to vector<1x16x64xf32>
    %473 = vector.broadcast %471 : f32 to vector<1x16x64xf32>
    %474 = arith.mulf %473, %472 : vector<1x16x64xf32>
    %475 = arith.addf %470, %474 : vector<1x16x64xf32>
    %c90 = arith.constant 90 : index
    %476 = memref.load %arg1[%c90] : memref<98xf32, #tpu.memory_space<smem>>
    %477 = vector.extract_strided_slice %445 {offsets = [0, 0, 24], sizes = [1, 16, 64], strides = [1, 1, 1]} : vector<1x16x88xf32> to vector<1x16x64xf32>
    %478 = vector.broadcast %476 : f32 to vector<1x16x64xf32>
    %479 = arith.mulf %478, %477 : vector<1x16x64xf32>
    %480 = arith.addf %475, %479 : vector<1x16x64xf32>
    %c0_77 = arith.constant 0 : index
    %c6_78 = arith.constant 6 : index
    %c0_79 = arith.constant 0 : index
    %481 = vector.load %arg7[%c0_77, %c6_78, %c0_79] : memref<1x22x88xf32, #tpu.memory_space<vmem>>, vector<1x16x88xf32>
    %c91 = arith.constant 91 : index
    %482 = memref.load %arg1[%c91] : memref<98xf32, #tpu.memory_space<smem>>
    %483 = vector.extract_strided_slice %481 {offsets = [0, 0, 0], sizes = [1, 16, 64], strides = [1, 1, 1]} : vector<1x16x88xf32> to vector<1x16x64xf32>
    %484 = vector.broadcast %482 : f32 to vector<1x16x64xf32>
    %485 = arith.mulf %484, %483 : vector<1x16x64xf32>
    %486 = arith.addf %480, %485 : vector<1x16x64xf32>
    %c92 = arith.constant 92 : index
    %487 = memref.load %arg1[%c92] : memref<98xf32, #tpu.memory_space<smem>>
    %488 = vector.extract_strided_slice %481 {offsets = [0, 0, 4], sizes = [1, 16, 64], strides = [1, 1, 1]} : vector<1x16x88xf32> to vector<1x16x64xf32>
    %489 = vector.broadcast %487 : f32 to vector<1x16x64xf32>
    %490 = arith.mulf %489, %488 : vector<1x16x64xf32>
    %491 = arith.addf %486, %490 : vector<1x16x64xf32>
    %c93 = arith.constant 93 : index
    %492 = memref.load %arg1[%c93] : memref<98xf32, #tpu.memory_space<smem>>
    %493 = vector.extract_strided_slice %481 {offsets = [0, 0, 8], sizes = [1, 16, 64], strides = [1, 1, 1]} : vector<1x16x88xf32> to vector<1x16x64xf32>
    %494 = vector.broadcast %492 : f32 to vector<1x16x64xf32>
    %495 = arith.mulf %494, %493 : vector<1x16x64xf32>
    %496 = arith.addf %491, %495 : vector<1x16x64xf32>
    %c94 = arith.constant 94 : index
    %497 = memref.load %arg1[%c94] : memref<98xf32, #tpu.memory_space<smem>>
    %498 = vector.extract_strided_slice %481 {offsets = [0, 0, 12], sizes = [1, 16, 64], strides = [1, 1, 1]} : vector<1x16x88xf32> to vector<1x16x64xf32>
    %499 = vector.broadcast %497 : f32 to vector<1x16x64xf32>
    %500 = arith.mulf %499, %498 : vector<1x16x64xf32>
    %501 = arith.addf %496, %500 : vector<1x16x64xf32>
    %c95 = arith.constant 95 : index
    %502 = memref.load %arg1[%c95] : memref<98xf32, #tpu.memory_space<smem>>
    %503 = vector.extract_strided_slice %481 {offsets = [0, 0, 16], sizes = [1, 16, 64], strides = [1, 1, 1]} : vector<1x16x88xf32> to vector<1x16x64xf32>
    %504 = vector.broadcast %502 : f32 to vector<1x16x64xf32>
    %505 = arith.mulf %504, %503 : vector<1x16x64xf32>
    %506 = arith.addf %501, %505 : vector<1x16x64xf32>
    %c96 = arith.constant 96 : index
    %507 = memref.load %arg1[%c96] : memref<98xf32, #tpu.memory_space<smem>>
    %508 = vector.extract_strided_slice %481 {offsets = [0, 0, 20], sizes = [1, 16, 64], strides = [1, 1, 1]} : vector<1x16x88xf32> to vector<1x16x64xf32>
    %509 = vector.broadcast %507 : f32 to vector<1x16x64xf32>
    %510 = arith.mulf %509, %508 : vector<1x16x64xf32>
    %511 = arith.addf %506, %510 : vector<1x16x64xf32>
    %c97 = arith.constant 97 : index
    %512 = memref.load %arg1[%c97] : memref<98xf32, #tpu.memory_space<smem>>
    %513 = vector.extract_strided_slice %481 {offsets = [0, 0, 24], sizes = [1, 16, 64], strides = [1, 1, 1]} : vector<1x16x88xf32> to vector<1x16x64xf32>
    %514 = vector.broadcast %512 : f32 to vector<1x16x64xf32>
    %515 = arith.mulf %514, %513 : vector<1x16x64xf32>
    %516 = arith.addf %511, %515 : vector<1x16x64xf32>
    %517 = arith.addf %159, %266 : vector<1x16x64xf32>
    %518 = arith.addf %409, %516 : vector<1x16x64xf32>
    %519 = arith.addf %517, %518 : vector<1x16x64xf32>
    %c0_80 = arith.constant 0 : index
    %520 = memref.load %arg2[%c0_80] : memref<1xf32, #tpu.memory_space<smem>>
    %521 = vector.broadcast %520 : f32 to vector<1x16x64xf32>
    %522 = arith.addf %519, %521 : vector<1x16x64xf32>
    %523 = arith.negf %522 : vector<1x16x64xf32>
    %524 = math.exp %523 : vector<1x16x64xf32>
    %cst_81 = arith.constant 1.000000e+00 : f32
    %525 = vector.broadcast %cst_81 : f32 to vector<1x16x64xf32>
    %526 = arith.addf %525, %524 : vector<1x16x64xf32>
    %527 = arith.divf %525, %526 : vector<1x16x64xf32>
    %c0_82 = arith.constant 0 : index
    %c0_83 = arith.constant 0 : index
    %c0_84 = arith.constant 0 : index
    %c0_85 = arith.constant 0 : index
    %528 = vector.load %arg4[%c0_82, %c0_83, %c0_84, %c0_85] : memref<1x8x16x64xf32, #tpu.memory_space<vmem>>, vector<1x8x16x64xf32>
    %529 = vector.shape_cast %527 : vector<1x16x64xf32> to vector<1x1x16x64xf32>
    %530 = vector.broadcast %529 : vector<1x1x16x64xf32> to vector<1x8x16x64xf32>
    %531 = arith.mulf %528, %530 : vector<1x8x16x64xf32>
    %c0_86 = arith.constant 0 : index
    %c0_87 = arith.constant 0 : index
    %c0_88 = arith.constant 0 : index
    %c0_89 = arith.constant 0 : index
    %532 = vector.load %arg5[%c0_86, %c0_87, %c0_88, %c0_89] : memref<1x8x16x64xf32, #tpu.memory_space<vmem>>, vector<1x8x16x64xf32>
    tpu.vector_store %arg5[%c0_86, %c0_87, %c0_88, %c0_89], %531 {strides = array<i32>} : memref<1x8x16x64xf32, #tpu.memory_space<vmem>>, vector<1x8x16x64xf32>,
    return
  }
  func.func @transform_0(%arg0: i32) -> i32 {
    %c0_i32 = arith.constant 0 : i32
    %c0_i32_0 = arith.constant 0 : i32
    return %c0_i32 : i32
  }
  func.func @transform_1(%arg0: i32) -> i32 {
    %c0_i32 = arith.constant 0 : i32
    %c0_i32_0 = arith.constant 0 : i32
    return %c0_i32 : i32
  }
  func.func @transform_2(%arg0: i32) -> (i32, i32, i32, i32) {
    %c0_i32 = arith.constant 0 : i32
    %c0_i32_0 = arith.constant 0 : i32
    %c0_i32_1 = arith.constant 0 : i32
    %c0_i32_2 = arith.constant 0 : i32
    return %arg0, %c0_i32, %c0_i32_0, %c0_i32_1 : i32, i32, i32, i32
  }
  func.func @transform_3(%arg0: i32) -> (i32, i32, i32, i32) {
    %c0_i32 = arith.constant 0 : i32
    %c0_i32_0 = arith.constant 0 : i32
    %c0_i32_1 = arith.constant 0 : i32
    %c0_i32_2 = arith.constant 0 : i32
    return %arg0, %c0_i32, %c0_i32_0, %c0_i32_1 : i32, i32, i32, i32
  }
  func.func @transform_4(%arg0: i32) -> (i32, i32, i32, i32) {
    %c0_i32 = arith.constant 0 : i32
    %c0_i32_0 = arith.constant 0 : i32
    %c0_i32_1 = arith.constant 0 : i32
    %c0_i32_2 = arith.constant 0 : i32
    return %arg0, %c0_i32, %c0_i32_0, %c0_i32_1 : i32, i32, i32, i32
  }
}

</mosaic_0001>

<llo_original>
// kernel: tpu_custom_call.1
$region0: #{tpu_custom_call.1}
  #allocation0 [shape = 'u32[]', space=smem, size = 0x4, offset = 0x4, fixed_abs, tag = 'smem constant byte address 0x4 - core index']
  #allocation1 [shape = 'u32[144,128]{1,0:T(1,128)}', space=vmem, size = 0x12000, scoped, tag = 'internal scratch']
  #allocation2 [shape = 'f32[1,22,88]{2,1,0:T(8,128)}', space=vmem, size = 0x3000, scoped, tag = 'scratch operand']
  #allocation3 [shape = 'f32[1,22,88]{2,1,0:T(8,128)}', space=vmem, size = 0x3000, scoped, tag = 'scratch operand']
  #allocation4 [shape = 'f32[1]{0:T(128)S(6)}', space=smem, size = 0x200, scoped, tag = 'scoped memory for tpu_custom_call.1']
  %s0 = inlined_call_operand.vmem [shape: f32[98], index: 0, kind: input, shape index: {}]
  %s1 = inlined_call_operand.<no memory space> [shape: f32[1], index: 1, kind: input, shape index: {}]
  %s2 = inlined_call_operand.hbm [shape: f32[2,4,16,64], index: 2, kind: input, shape index: {}]
  %s3 = inlined_call_operand.hbm [shape: f32[2,8,16,64], index: 3, kind: input, shape index: {}]
  %s4 = inlined_call_operand.hbm [shape: f32[2,8,16,64], index: 4, kind: output, shape index: {}]
  %s5 = sld [smem:[#allocation0]]
  $region61: #{tpu_custom_call.1} parent=0
    _
  %s7 = ssub.s32 1, %s5
  %s8 = scalar_select 0, %s7, %s5
  %9 = sst [smem:[#allocation4]] %s1
  $region1: #{tpu_custom_call.1} parent=0
    #allocation5 [shape = 'u8[512]{0}', space=smem, size = 0x200, scoped, tag = 'input window, operand 0, single buffered']
    #allocation6 [shape = 's32[2]{0}', space=sflag, size = 0x8, scoped, tag = 'scoped memory for tpu_custom_call.1']
    #allocation7 [shape = 's32[2]{0}', space=sflag, size = 0x8, scoped, tag = 'scoped memory for tpu_custom_call.1']
    #allocation8 [shape = 's32[2]{0}', space=sflag, size = 0x8, scoped, tag = 'scoped memory for tpu_custom_call.1']
    #allocation9 [shape = 'u8[65536]{0}', space=vmem, size = 0x10000, scoped, tag = 'input window, operand 2']
    #allocation10 [shape = 'u8[131072]{0}', space=vmem, size = 0x20000, scoped, tag = 'input window, operand 3']
    #allocation11 [shape = 's32[2]{0}', space=sflag, size = 0x8, scoped, tag = 'scoped memory for tpu_custom_call.1']
    #allocation12 [shape = 'u8[131072]{0}', space=vmem, size = 0x20000, scoped, tag = 'output window, operand 0']
    %10 = vsyncpa [#allocation8], 0
    %11 = vsyncpa [#allocation6], 0
    %s12 = scalar_lea.sflag [#allocation6], 1
    %13 = vsyncpa %s12, 0
    %14 = vsyncpa [#allocation11], 0
    %s15 = scalar_lea.sflag [#allocation11], 1
    %16 = vsyncpa %s15, 0
    %17 = vsyncpa [#allocation7], 0
    %s18 = scalar_lea.sflag [#allocation7], 1
    %19 = vsyncpa %s18, 0
    loop: start=0, step=1, limit=4
    $region2: #{tpu_custom_call.1} parent=1 // loop_pre_header
      _
    $region3: #{tpu_custom_call.1} parent=1 // loop_header
      %s21 = sphi 0, %s25
      %p22 = scmp.ge.s32.totalorder %s21, 4
      %s29 = sphi 0, %s29
      %s31 = sphi 0, %s29
      %s32 = sphi 0, %s31
      %s46 = sphi 0, %s32
      %s50 = sphi 0, %s50
      %s52 = sphi 0, %s50
      %s53 = sphi 0, %s52
      %s67 = sphi 0, %s53
      %s73 = sphi 0, %s75
      %s76 = sphi 0, %s73
      %s77 = sphi 0, %s76
      %s93 = sphi 0, %s77
      %s99 = sphi 0, %s101
      %s102 = sphi 0, %s99
      %s103 = sphi 0, %s102
      %s119 = sphi 0, %s103
      %s125 = sphi 0, %s127
      %s128 = sphi 0, %s125
      %s129 = sphi 0, %s128
      %s145 = sphi 0, %s129
    $region4: #{tpu_custom_call.1} parent=1 // loop_header_branch
      %24 = sbr.rel (%p22) target = $region8
    $region5: #{tpu_custom_call.1} parent=1 // loop_body
      %s26 = ssub.s32 %s21, 1
      %s27 = ssub.s32 %s21, 2
      %s28 = sadd.s32 %s21, 1
      %s30 = sadd.s32 %s29, 1
      %p33 = scmp.eq.s32.totalorder %s21, 1
      %p34 = scmp.ne.s32.totalorder %s29, %s31
      %p35 = scmp.eq.s32.totalorder %s21, 0
      %p36 = por %p34, %p35
      %p37 = scmp.ne.s32.totalorder %s29, %s31
      %p38 = scmp.eq.s32.totalorder %s26, 1
      %p39 = por %p37, %p38
      %p40 = scmp.ne.s32.totalorder %s31, %s32
      %p41 = scmp.eq.s32.totalorder %s26, 0
      %p42 = por %p40, %p41
      %p43 = scmp.ne.s32.totalorder %s31, %s32
      %p44 = scmp.eq.s32.totalorder %s27, 1
      %p45 = por %p43, %p44
      %p47 = scmp.ne.s32.totalorder %s32, %s46
      %p48 = scmp.eq.s32.totalorder %s27, 0
      %p49 = por %p47, %p48
      %s51 = sadd.s32 %s50, 1
      %p54 = scmp.eq.s32.totalorder %s21, 1
      %p55 = scmp.ne.s32.totalorder %s50, %s52
      %p56 = scmp.eq.s32.totalorder %s21, 0
      %p57 = por %p55, %p56
      %p58 = scmp.ne.s32.totalorder %s50, %s52
      %p59 = scmp.eq.s32.totalorder %s26, 1
      %p60 = por %p58, %p59
      %p61 = scmp.ne.s32.totalorder %s52, %s53
      %p62 = scmp.eq.s32.totalorder %s26, 0
      %p63 = por %p61, %p62
      %p64 = scmp.ne.s32.totalorder %s52, %s53
      %p65 = scmp.eq.s32.totalorder %s27, 1
      %p66 = por %p64, %p65
      %p68 = scmp.ne.s32.totalorder %s53, %s67
      %p69 = scmp.eq.s32.totalorder %s27, 0
      %p70 = por %p68, %p69
      %s71 = ssub.s32 %s21, %s28
      %p72 = scmp.eq.s32.totalorder %s71, 0
      %s74 = sadd.s32 %s73, 1
      %s75 = scalar_select %p72, %s73, %s74
      %p78 = pneg %p72
      %p79 = scmp.eq.s32.totalorder %s21, 1
      %p80 = por %p78, %p79
      %p81 = scmp.ne.s32.totalorder %s73, %s76
      %p82 = scmp.eq.s32.totalorder %s21, 0
      %p83 = por %p81, %p82
      %p84 = scmp.ne.s32.totalorder %s73, %s76
      %p85 = scmp.eq.s32.totalorder %s26, 1
      %p86 = por %p84, %p85
      %p87 = scmp.ne.s32.totalorder %s76, %s77
      %p88 = scmp.eq.s32.totalorder %s26, 0
      %p89 = por %p87, %p88
      %p90 = scmp.ne.s32.totalorder %s76, %s77
      %p91 = scmp.eq.s32.totalorder %s27, 1
      %p92 = por %p90, %p91
      %p94 = scmp.ne.s32.totalorder %s77, %s93
      %p95 = scmp.eq.s32.totalorder %s27, 0
      %p96 = por %p94, %p95
      %s97 = ssub.s32 %s21, %s28
      %p98 = scmp.eq.s32.totalorder %s97, 0
      %s100 = sadd.s32 %s99, 1
      %s101 = scalar_select %p98, %s99, %s100
      %p104 = pneg %p98
      %p105 = scmp.eq.s32.totalorder %s21, 1
      %p106 = por %p104, %p105
      %p107 = scmp.ne.s32.totalorder %s99, %s102
      %p108 = scmp.eq.s32.totalorder %s21, 0
      %p109 = por %p107, %p108
      %p110 = scmp.ne.s32.totalorder %s99, %s102
      %p111 = scmp.eq.s32.totalorder %s26, 1
      %p112 = por %p110, %p111
      %p113 = scmp.ne.s32.totalorder %s102, %s103
      %p114 = scmp.eq.s32.totalorder %s26, 0
      %p115 = por %p113, %p114
      %p116 = scmp.ne.s32.totalorder %s102, %s103
      %p117 = scmp.eq.s32.totalorder %s27, 1
      %p118 = por %p116, %p117
      %p120 = scmp.ne.s32.totalorder %s103, %s119
      %p121 = scmp.eq.s32.totalorder %s27, 0
      %p122 = por %p120, %p121
      %s123 = ssub.s32 %s21, %s28
      %p124 = scmp.eq.s32.totalorder %s123, 0
      %s126 = sadd.s32 %s125, 1
      %s127 = scalar_select %p124, %s125, %s126
      %p130 = pneg %p124
      %p131 = scmp.eq.s32.totalorder %s21, 1
      %p132 = por %p130, %p131
      %p133 = scmp.ne.s32.totalorder %s125, %s128
      %p134 = scmp.eq.s32.totalorder %s21, 0
      %p135 = por %p133, %p134
      %p136 = scmp.ne.s32.totalorder %s125, %s128
      %p137 = scmp.eq.s32.totalorder %s26, 1
      %p138 = por %p136, %p137
      %p139 = scmp.ne.s32.totalorder %s128, %s129
      %p140 = scmp.eq.s32.totalorder %s26, 0
      %p141 = por %p139, %p140
      %p142 = scmp.ne.s32.totalorder %s128, %s129
      %p143 = scmp.eq.s32.totalorder %s27, 1
      %p144 = por %p142, %p143
      %p146 = scmp.ne.s32.totalorder %s129, %s145
      %p147 = scmp.eq.s32.totalorder %s27, 0
      %p148 = por %p146, %p147
      %p149 = scmp.le.s32.totalorder 1, %s21
      %p150 = scmp.lt.s32.totalorder %s21, 3
      %p151 = pnand %p149, %p150
      %p152 = pneg %p151
      // Predicated region
      $region9: #{tpu_custom_call.1} parent=5 // pred_check
        _
      $region10: #{tpu_custom_call.1} parent=5 // pred_check_branch
        %154 = sbr.rel (%p151) target = $region12
      $region11: #{tpu_custom_call.1} parent=5 // pred_region
        %s155 = ssub.s32 %s21, 1
        // Predicated region
        $region13: #{tpu_custom_call.1} parent=11 // pred_check
          %p156 = pneg %p42
        $region14: #{tpu_custom_call.1} parent=11 // pred_check_branch
          %158 = sbr.rel (%p156) target = $region16
        $region15: #{tpu_custom_call.1} parent=11 // pred_region
          %s160 = ssub.s32 16, 16
          %161 = vsyncadd [#allocation8], %s160
          %s163 = sshll.u32 %s0, 4
          %s164 = int_to_ptr.vmem [resolvable:$true] %s163
          %166 = dma.vmem_to_smem %s164, 16, [#allocation5], [#allocation8]
        $region16: #{tpu_custom_call.1} parent=11 // pred_fallthru
          _
        // Predicated region
        $region17: #{tpu_custom_call.1} parent=11 // pred_check
          %p167 = pneg %p63
        $region18: #{tpu_custom_call.1} parent=11 // pred_check_branch
          %169 = sbr.rel (%p167) target = $region20
        $region19: #{tpu_custom_call.1} parent=11 // pred_region
          _
        $region20: #{tpu_custom_call.1} parent=11 // pred_fallthru
          _
      $region12: #{tpu_custom_call.1} parent=5 // pred_fallthru
        _
      %p170 = scmp.lt.s32.totalorder %s21, 2
      // Predicated region
      $region21: #{tpu_custom_call.1} parent=5 // pred_check
        %p171 = pneg %p170
      $region22: #{tpu_custom_call.1} parent=5 // pred_check_branch
        %173 = sbr.rel (%p171) target = $region24
      $region23: #{tpu_custom_call.1} parent=5 // pred_region
        // Predicated region
        $region25: #{tpu_custom_call.1} parent=23 // pred_check
          %p174 = pneg %p83
        $region26: #{tpu_custom_call.1} parent=23 // pred_check_branch
          %176 = sbr.rel (%p174) target = $region28
        $region27: #{tpu_custom_call.1} parent=23 // pred_region
          %s177 = sand.u32 %s73, 1
          %s178 = scalar_lea.sflag [#allocation6], %s177
          %s179 = sand.u32 %s73, 1
          %s180 = smul.addr %s179, 64
          %s181 = scalar_lea.vmem [#allocation9], %s180
          %s183 = ssub.s32 1024, 1024
          %184 = vsyncadd %s178, %s183
          %s185 = smul.addr %s21, 8
          %s186 = smul.addr %s185, 128
          %s187 = scalar_lea.hbm %s2, %s186
          %s188 = sshll.u32 %s181, 4
          %s189 = int_to_ptr.vmem [resolvable:$true] %s188
          %194 = dma.hbm_to_vmem [thread:$0]  %s187, 1024, %s189, %s178, 128, 128, 8
        $region28: #{tpu_custom_call.1} parent=23 // pred_fallthru
          _
        // Predicated region
        $region29: #{tpu_custom_call.1} parent=23 // pred_check
          %p195 = pneg %p109
        $region30: #{tpu_custom_call.1} parent=23 // pred_check_branch
          %197 = sbr.rel (%p195) target = $region32
        $region31: #{tpu_custom_call.1} parent=23 // pred_region
          %s198 = sand.u32 %s99, 1
          %s199 = scalar_lea.sflag [#allocation11], %s198
          %s200 = sand.u32 %s99, 1
          %s201 = smul.addr %s200, 128
          %s202 = scalar_lea.vmem [#allocation10], %s201
          %s204 = ssub.s32 2048, 2048
          %205 = vsyncadd %s199, %s204
          %s206 = smul.addr %s21, 16
          %s207 = smul.addr %s206, 128
          %s208 = scalar_lea.hbm %s3, %s207
          %s209 = sshll.u32 %s202, 4
          %s210 = int_to_ptr.vmem [resolvable:$true] %s209
          %215 = dma.hbm_to_vmem [thread:$0]  %s208, 2048, %s210, %s199, 128, 128, 8
        $region32: #{tpu_custom_call.1} parent=23 // pred_fallthru
          _
      $region24: #{tpu_custom_call.1} parent=5 // pred_fallthru
        _
      %p216 = scmp.le.s32.totalorder 1, %s21
      %p217 = scmp.lt.s32.totalorder %s21, 3
      %p218 = pnand %p216, %p217
      %p219 = pneg %p218
      // Predicated region
      $region33: #{tpu_custom_call.1} parent=5 // pred_check
        _
      $region34: #{tpu_custom_call.1} parent=5 // pred_check_branch
        %221 = sbr.rel (%p218) target = $region36
      $region35: #{tpu_custom_call.1} parent=5 // pred_region
        %s222 = ssub.s32 %s21, 1
        // Predicated region
        $region37: #{tpu_custom_call.1} parent=35 // pred_check
          %p223 = pneg %p42
        $region38: #{tpu_custom_call.1} parent=35 // pred_check_branch
          %225 = sbr.rel (%p223) target = $region40
        $region39: #{tpu_custom_call.1} parent=35 // pred_region
          %226 = dma.done [#allocation8], 16
        $region40: #{tpu_custom_call.1} parent=35 // pred_fallthru
          _
        %s227 = sand.u32 %s76, 1
        %s228 = scalar_lea.sflag [#allocation6], %s227
        %s229 = sand.u32 %s76, 1
        %s230 = smul.addr %s229, 64
        %s231 = scalar_lea.vmem [#allocation9], %s230
        // Predicated region
        $region41: #{tpu_custom_call.1} parent=35 // pred_check
          %p232 = pneg %p89
        $region42: #{tpu_custom_call.1} parent=35 // pred_check_branch
          %234 = sbr.rel (%p232) target = $region44
        $region43: #{tpu_custom_call.1} parent=35 // pred_region
          %235 = dma.done %s228, 1024
        $region44: #{tpu_custom_call.1} parent=35 // pred_fallthru
          _
        %s236 = sand.u32 %s102, 1
        %s237 = scalar_lea.sflag [#allocation11], %s236
        %s238 = sand.u32 %s102, 1
        %s239 = smul.addr %s238, 128
        %s240 = scalar_lea.vmem [#allocation10], %s239
        // Predicated region
        $region45: #{tpu_custom_call.1} parent=35 // pred_check
          %p241 = pneg %p115
        $region46: #{tpu_custom_call.1} parent=35 // pred_check_branch
          %243 = sbr.rel (%p241) target = $region48
        $region47: #{tpu_custom_call.1} parent=35 // pred_region
          %244 = dma.done %s237, 2048
        $region48: #{tpu_custom_call.1} parent=35 // pred_fallthru
          _
        %245 = sfence
        %p246 = pneg %p42
        %p247 = pneg %p39
        %p248 = pneg %p63
        %p249 = pneg %p60
        %s250 = sand.u32 %s76, 1
        %s251 = scalar_lea.sflag [#allocation6], %s250
        %s252 = sand.u32 %s76, 1
        %s253 = smul.addr %s252, 64
        %s254 = scalar_lea.vmem [#allocation9], %s253
        %p255 = pneg %p89
        %p256 = pneg %p86
        %s257 = sand.u32 %s102, 1
        %s258 = scalar_lea.sflag [#allocation11], %s257
        %s259 = sand.u32 %s102, 1
        %s260 = smul.addr %s259, 128
        %s261 = scalar_lea.vmem [#allocation10], %s260
        %p262 = pneg %p115
        %p263 = pneg %p112
        %p264 = pneg %p141
        %p265 = pneg %p138
        %s266 = sand.u32 %s128, 1
        %s267 = scalar_lea.sflag [#allocation7], %s266
        %s268 = sand.u32 %s128, 1
        %s269 = smul.addr %s268, 128
        %s270 = scalar_lea.vmem [#allocation12], %s269
        %v271 = vld [vmem:[%s231] sm:$0xff]
        %v272 = vld [vmem:[%s231 + $0x8] sm:$0xff]
        %v273 = vld [vmem:[%s231 + $0x10] sm:$0xff]
        %v274 = vld [vmem:[%s231 + $0x18] sm:$0xff]
        %v275 = vld [vmem:[%s231 + $0x20] sm:$0xff]
        %v276 = vld [vmem:[%s231 + $0x28] sm:$0xff]
        %v277 = vld [vmem:[%s231 + $0x30] sm:$0xff]
        %v278 = vld [vmem:[%s231 + $0x38] sm:$0xff]
        %vm279 = vcmask 523264
        %v280 = vsel %vm279, %v271, -inf
        %v281 = vsel %vm279, %v273, -inf
        %v282 = vsel %vm279, %v275, -inf
        %v283 = vmax.f32 %v280, %v282
        %v284 = vsel %vm279, %v277, -inf
        %v285 = vmax.f32 %v281, %v284
        %v286 = vmax.f32 %v283, %v285
        %v287 = vsel %vm279, %v272, -inf
        %v288 = vsel %vm279, %v274, -inf
        %v289 = vsel %vm279, %v276, -inf
        %v290 = vmax.f32 %v287, %v289
        %v291 = vsel %vm279, %v278, -inf
        %v292 = vmax.f32 %v288, %v291
        %v293 = vmax.f32 %v290, %v292
        %v294 = vsel %vm279, %v271, 0.0
        %v295 = vsel %vm279, %v273, 0.0
        %v296 = vadd.f32 %v294, %v295
        %v297 = vsel %vm279, %v275, 0.0
        %v298 = vadd.f32 %v296, %v297
        %v299 = vsel %vm279, %v277, 0.0
        %v300 = vadd.f32 %v298, %v299
        %v301 = vsel %vm279, %v272, 0.0
        %v302 = vsel %vm279, %v274, 0.0
        %v303 = vadd.f32 %v301, %v302
        %v304 = vsel %vm279, %v276, 0.0
        %v305 = vadd.f32 %v303, %v304
        %v306 = vsel %vm279, %v278, 0.0
        %v307 = vadd.f32 %v305, %v306
        %v308 = vrcp.pop 4.0
        %v309 = vmul.f32 %v300, %v308
        %v310 = vmul.f32 %v307, %v308
        %vm311 = vcmask 714752
        %312 = vst.msk [vmem:[#allocation2] sm:$0x7] %vm311, 0.0
        %313 = vst.msk [vmem:[#allocation2 + $0x13] sm:$0x7] %vm311, 0.0
        %vm314 = vcmask 97280
        %315 = vst.msk [vmem:[#allocation2 + $0x3] sm:$0xff] %vm314, 0.0
        %316 = vst.msk [vmem:[#allocation2 + $0xb] sm:$0xff] %vm314, 0.0
        %vm317 = vcmask 720480
        %318 = vst.msk [vmem:[#allocation2 + $0x3] sm:$0xff] %vm317, 0.0
        %319 = vst.msk [vmem:[#allocation2 + $0xb] sm:$0xff] %vm317, 0.0
        %322 = vrot.lane.b32.xlu0 %v286, 12
        %v323 = vpop.permute.xlu0 %322
        %324 = vrot.lane.b32.xlu0 %v293, 12
        %v325 = vpop.permute.xlu0 %324
        %vm328 = vcmask 621664
        %329 = vst.msk [vmem:[#allocation2 + $0x3] sm:$0xff] %vm328, %v323
        %330 = vst.msk [vmem:[#allocation2 + $0xb] sm:$0xff] %vm328, %v325
        %331 = vst.msk [vmem:[#allocation3] sm:$0x7] %vm311, 0.0
        %332 = vst.msk [vmem:[#allocation3 + $0x13] sm:$0x7] %vm311, 0.0
        %333 = vst.msk [vmem:[#allocation3 + $0x3] sm:$0xff] %vm314, 0.0
        %334 = vst.msk [vmem:[#allocation3 + $0xb] sm:$0xff] %vm314, 0.0
        %335 = vst.msk [vmem:[#allocation3 + $0x3] sm:$0xff] %vm317, 0.0
        %336 = vst.msk [vmem:[#allocation3 + $0xb] sm:$0xff] %vm317, 0.0
        %339 = vrot.lane.b32.xlu0 %v309, 12
        %v340 = vpop.permute.xlu0 %339
        %341 = vrot.lane.b32.xlu0 %v310, 12
        %v342 = vpop.permute.xlu0 %341
        %345 = vst.msk [vmem:[#allocation3 + $0x3] sm:$0xff] %vm328, %v340
        %346 = vst.msk [vmem:[#allocation3 + $0xb] sm:$0xff] %vm328, %v342
        %v347 = vld [vmem:[#allocation2] sm:$0xff]
        %v348 = vld [vmem:[#allocation2 + $0x8] sm:$0xff]
        %s349 = sld [smem:[#allocation5]]
        %v350 = vstv %s349
        %v351 = vmul.f32 %v350, %v347
        %v352 = vmul.f32 %v350, %v348
        %s353 = sld [smem:[#allocation5 + $0x1]]
        %v354 = vstv %s353
        %v355 = vmul.f32 %v354, %v347
        %v356 = vmul.f32 %v354, %v348
        %359 = vrot.lane.b32.xlu0 %v355, 124
        %v360 = vpop.permute.xlu0 %359
        %361 = vrot.lane.b32.xlu0 %v356, 124
        %v362 = vpop.permute.xlu0 %361
        %v365 = vadd.f32 %v351, %v360
        %v366 = vadd.f32 %v352, %v362
        %s367 = sld [smem:[#allocation5 + $0x2]]
        %v368 = vstv %s367
        %v369 = vmul.f32 %v368, %v347
        %v370 = vmul.f32 %v368, %v348
        %373 = vrot.lane.b32.xlu0 %v369, 120
        %v374 = vpop.permute.xlu0 %373
        %375 = vrot.lane.b32.xlu0 %v370, 120
        %v376 = vpop.permute.xlu0 %375
        %v379 = vadd.f32 %v365, %v374
        %v380 = vadd.f32 %v366, %v376
        %s381 = sld [smem:[#allocation5 + $0x3]]
        %v382 = vstv %s381
        %v383 = vmul.f32 %v382, %v347
        %v384 = vmul.f32 %v382, %v348
        %387 = vrot.lane.b32.xlu0 %v383, 116
        %v388 = vpop.permute.xlu0 %387
        %389 = vrot.lane.b32.xlu0 %v384, 116
        %v390 = vpop.permute.xlu0 %389
        %v393 = vadd.f32 %v379, %v388
        %v394 = vadd.f32 %v380, %v390
        %s395 = sld [smem:[#allocation5 + $0x4]]
        %v396 = vstv %s395
        %v397 = vmul.f32 %v396, %v347
        %v398 = vmul.f32 %v396, %v348
        %401 = vrot.lane.b32.xlu0 %v397, 112
        %v402 = vpop.permute.xlu0 %401
        %403 = vrot.lane.b32.xlu0 %v398, 112
        %v404 = vpop.permute.xlu0 %403
        %v407 = vadd.f32 %v393, %v402
        %v408 = vadd.f32 %v394, %v404
        %s409 = sld [smem:[#allocation5 + $0x5]]
        %v410 = vstv %s409
        %v411 = vmul.f32 %v410, %v347
        %v412 = vmul.f32 %v410, %v348
        %415 = vrot.lane.b32.xlu0 %v411, 108
        %v416 = vpop.permute.xlu0 %415
        %417 = vrot.lane.b32.xlu0 %v412, 108
        %v418 = vpop.permute.xlu0 %417
        %v421 = vadd.f32 %v407, %v416
        %v422 = vadd.f32 %v408, %v418
        %s423 = sld [smem:[#allocation5 + $0x6]]
        %v424 = vstv %s423
        %v425 = vmul.f32 %v424, %v347
        %v426 = vmul.f32 %v424, %v348
        %429 = vrot.lane.b32.xlu0 %v425, 104
        %v430 = vpop.permute.xlu0 %429
        %431 = vrot.lane.b32.xlu0 %v426, 104
        %v432 = vpop.permute.xlu0 %431
        %v435 = vadd.f32 %v421, %v430
        %v436 = vadd.f32 %v422, %v432
        %v437 = vld [vmem:[#allocation2 + $0x1] sm:$0xff]
        %v438 = vld [vmem:[#allocation2 + $0x9] sm:$0xff]
        %s439 = sld [smem:[#allocation5 + $0x7]]
        %v440 = vstv %s439
        %v441 = vmul.f32 %v440, %v437
        %v442 = vmul.f32 %v440, %v438
        %v443 = vadd.f32 %v435, %v441
        %v444 = vadd.f32 %v436, %v442
        %s445 = sld [smem:[#allocation5 + $0x8]]
        %v446 = vstv %s445
        %v447 = vmul.f32 %v446, %v437
        %v448 = vmul.f32 %v446, %v438
        %451 = vrot.lane.b32.xlu0 %v447, 124
        %v452 = vpop.permute.xlu0 %451
        %453 = vrot.lane.b32.xlu0 %v448, 124
        %v454 = vpop.permute.xlu0 %453
        %v457 = vadd.f32 %v443, %v452
        %v458 = vadd.f32 %v444, %v454
        %s459 = sld [smem:[#allocation5 + $0x9]]
        %v460 = vstv %s459
        %v461 = vmul.f32 %v460, %v437
        %v462 = vmul.f32 %v460, %v438
        %465 = vrot.lane.b32.xlu0 %v461, 120
        %v466 = vpop.permute.xlu0 %465
        %467 = vrot.lane.b32.xlu0 %v462, 120
        %v468 = vpop.permute.xlu0 %467
        %v471 = vadd.f32 %v457, %v466
        %v472 = vadd.f32 %v458, %v468
        %s473 = sld [smem:[#allocation5 + $0xa]]
        %v474 = vstv %s473
        %v475 = vmul.f32 %v474, %v437
        %v476 = vmul.f32 %v474, %v438
        %479 = vrot.lane.b32.xlu0 %v475, 116
        %v480 = vpop.permute.xlu0 %479
        %481 = vrot.lane.b32.xlu0 %v476, 116
        %v482 = vpop.permute.xlu0 %481
        %v485 = vadd.f32 %v471, %v480
        %v486 = vadd.f32 %v472, %v482
        %s487 = sld [smem:[#allocation5 + $0xb]]
        %v488 = vstv %s487
        %v489 = vmul.f32 %v488, %v437
        %v490 = vmul.f32 %v488, %v438
        %493 = vrot.lane.b32.xlu0 %v489, 112
        %v494 = vpop.permute.xlu0 %493
        %495 = vrot.lane.b32.xlu0 %v490, 112
        %v496 = vpop.permute.xlu0 %495
        %v499 = vadd.f32 %v485, %v494
        %v500 = vadd.f32 %v486, %v496
        %s501 = sld [smem:[#allocation5 + $0xc]]
        %v502 = vstv %s501
        %v503 = vmul.f32 %v502, %v437
        %v504 = vmul.f32 %v502, %v438
        %507 = vrot.lane.b32.xlu0 %v503, 108
        %v508 = vpop.permute.xlu0 %507
        %509 = vrot.lane.b32.xlu0 %v504, 108
        %v510 = vpop.permute.xlu0 %509
        %v513 = vadd.f32 %v499, %v508
        %v514 = vadd.f32 %v500, %v510
        %s515 = sld [smem:[#allocation5 + $0xd]]
        %v516 = vstv %s515
        %v517 = vmul.f32 %v516, %v437
        %v518 = vmul.f32 %v516, %v438
        %521 = vrot.lane.b32.xlu0 %v517, 104
        %v522 = vpop.permute.xlu0 %521
        %523 = vrot.lane.b32.xlu0 %v518, 104
        %v524 = vpop.permute.xlu0 %523
        %v527 = vadd.f32 %v513, %v522
        %v528 = vadd.f32 %v514, %v524
        %v529 = vld [vmem:[#allocation2 + $0x2] sm:$0xff]
        %v530 = vld [vmem:[#allocation2 + $0xa] sm:$0xff]
        %s531 = sld [smem:[#allocation5 + $0xe]]
        %v532 = vstv %s531
        %v533 = vmul.f32 %v532, %v529
        %v534 = vmul.f32 %v532, %v530
        %v535 = vadd.f32 %v527, %v533
        %v536 = vadd.f32 %v528, %v534
        %s537 = sld [smem:[#allocation5 + $0xf]]
        %v538 = vstv %s537
        %v539 = vmul.f32 %v538, %v529
        %v540 = vmul.f32 %v538, %v530
        %543 = vrot.lane.b32.xlu0 %v539, 124
        %v544 = vpop.permute.xlu0 %543
        %545 = vrot.lane.b32.xlu0 %v540, 124
        %v546 = vpop.permute.xlu0 %545
        %v549 = vadd.f32 %v535, %v544
        %v550 = vadd.f32 %v536, %v546
        %s551 = sld [smem:[#allocation5 + $0x10]]
        %v552 = vstv %s551
        %v553 = vmul.f32 %v552, %v529
        %v554 = vmul.f32 %v552, %v530
        %557 = vrot.lane.b32.xlu0 %v553, 120
        %v558 = vpop.permute.xlu0 %557
        %559 = vrot.lane.b32.xlu0 %v554, 120
        %v560 = vpop.permute.xlu0 %559
        %v563 = vadd.f32 %v549, %v558
        %v564 = vadd.f32 %v550, %v560
        %s565 = sld [smem:[#allocation5 + $0x11]]
        %v566 = vstv %s565
        %v567 = vmul.f32 %v566, %v529
        %v568 = vmul.f32 %v566, %v530
        %571 = vrot.lane.b32.xlu0 %v567, 116
        %v572 = vpop.permute.xlu0 %571
        %573 = vrot.lane.b32.xlu0 %v568, 116
        %v574 = vpop.permute.xlu0 %573
        %v577 = vadd.f32 %v563, %v572
        %v578 = vadd.f32 %v564, %v574
        %s579 = sld [smem:[#allocation5 + $0x12]]
        %v580 = vstv %s579
        %v581 = vmul.f32 %v580, %v529
        %v582 = vmul.f32 %v580, %v530
        %585 = vrot.lane.b32.xlu0 %v581, 112
        %v586 = vpop.permute.xlu0 %585
        %587 = vrot.lane.b32.xlu0 %v582, 112
        %v588 = vpop.permute.xlu0 %587
        %v591 = vadd.f32 %v577, %v586
        %v592 = vadd.f32 %v578, %v588
        %s593 = sld [smem:[#allocation5 + $0x13]]
        %v594 = vstv %s593
        %v595 = vmul.f32 %v594, %v529
        %v596 = vmul.f32 %v594, %v530
        %599 = vrot.lane.b32.xlu0 %v595, 108
        %v600 = vpop.permute.xlu0 %599
        %601 = vrot.lane.b32.xlu0 %v596, 108
        %v602 = vpop.permute.xlu0 %601
        %v605 = vadd.f32 %v591, %v600
        %v606 = vadd.f32 %v592, %v602
        %s607 = sld [smem:[#allocation5 + $0x14]]
        %v608 = vstv %s607
        %v609 = vmul.f32 %v608, %v529
        %v610 = vmul.f32 %v608, %v530
        %613 = vrot.lane.b32.xlu0 %v609, 104
        %v614 = vpop.permute.xlu0 %613
        %615 = vrot.lane.b32.xlu0 %v610, 104
        %v616 = vpop.permute.xlu0 %615
        %v619 = vadd.f32 %v605, %v614
        %v620 = vadd.f32 %v606, %v616
        %v621 = vld [vmem:[#allocation2 + $0x3] sm:$0xff]
        %v622 = vld [vmem:[#allocation2 + $0xb] sm:$0xff]
        %s623 = sld [smem:[#allocation5 + $0x15]]
        %v624 = vstv %s623
        %v625 = vmul.f32 %v624, %v621
        %v626 = vmul.f32 %v624, %v622
        %v627 = vadd.f32 %v619, %v625
        %v628 = vadd.f32 %v620, %v626
        %s629 = sld [smem:[#allocation5 + $0x16]]
        %v630 = vstv %s629
        %v631 = vmul.f32 %v630, %v621
        %v632 = vmul.f32 %v630, %v622
        %635 = vrot.lane.b32.xlu0 %v631, 124
        %v636 = vpop.permute.xlu0 %635
        %637 = vrot.lane.b32.xlu0 %v632, 124
        %v638 = vpop.permute.xlu0 %637
        %v641 = vadd.f32 %v627, %v636
        %v642 = vadd.f32 %v628, %v638
        %s643 = sld [smem:[#allocation5 + $0x17]]
        %v644 = vstv %s643
        %v645 = vmul.f32 %v644, %v621
        %v646 = vmul.f32 %v644, %v622
        %649 = vrot.lane.b32.xlu0 %v645, 120
        %v650 = vpop.permute.xlu0 %649
        %651 = vrot.lane.b32.xlu0 %v646, 120
        %v652 = vpop.permute.xlu0 %651
        %v655 = vadd.f32 %v641, %v650
        %v656 = vadd.f32 %v642, %v652
        %s657 = sld [smem:[#allocation5 + $0x18]]
        %v658 = vstv %s657
        %v659 = vmul.f32 %v658, %v621
        %v660 = vmul.f32 %v658, %v622
        %663 = vrot.lane.b32.xlu0 %v659, 116
        %v664 = vpop.permute.xlu0 %663
        %665 = vrot.lane.b32.xlu0 %v660, 116
        %v666 = vpop.permute.xlu0 %665
        %v669 = vadd.f32 %v655, %v664
        %v670 = vadd.f32 %v656, %v666
        %s671 = sld [smem:[#allocation5 + $0x19]]
        %v672 = vstv %s671
        %v673 = vmul.f32 %v672, %v621
        %v674 = vmul.f32 %v672, %v622
        %677 = vrot.lane.b32.xlu0 %v673, 112
        %v678 = vpop.permute.xlu0 %677
        %679 = vrot.lane.b32.xlu0 %v674, 112
        %v680 = vpop.permute.xlu0 %679
        %v683 = vadd.f32 %v669, %v678
        %v684 = vadd.f32 %v670, %v680
        %s685 = sld [smem:[#allocation5 + $0x1a]]
        %v686 = vstv %s685
        %v687 = vmul.f32 %v686, %v621
        %v688 = vmul.f32 %v686, %v622
        %691 = vrot.lane.b32.xlu0 %v687, 108
        %v692 = vpop.permute.xlu0 %691
        %693 = vrot.lane.b32.xlu0 %v688, 108
        %v694 = vpop.permute.xlu0 %693
        %v697 = vadd.f32 %v683, %v692
        %v698 = vadd.f32 %v684, %v694
        %s699 = sld [smem:[#allocation5 + $0x1b]]
        %v700 = vstv %s699
        %v701 = vmul.f32 %v700, %v621
        %v702 = vmul.f32 %v700, %v622
        %705 = vrot.lane.b32.xlu0 %v701, 104
        %v706 = vpop.permute.xlu0 %705
        %707 = vrot.lane.b32.xlu0 %v702, 104
        %v708 = vpop.permute.xlu0 %707
        %v711 = vadd.f32 %v697, %v706
        %v712 = vadd.f32 %v698, %v708
        %v713 = vld [vmem:[#allocation2 + $0x4] sm:$0xff]
        %v714 = vld [vmem:[#allocation2 + $0xc] sm:$0xff]
        %s715 = sld [smem:[#allocation5 + $0x1c]]
        %v716 = vstv %s715
        %v717 = vmul.f32 %v716, %v713
        %v718 = vmul.f32 %v716, %v714
        %s719 = sld [smem:[#allocation5 + $0x1d]]
        %v720 = vstv %s719
        %v721 = vmul.f32 %v720, %v713
        %v722 = vmul.f32 %v720, %v714
        %725 = vrot.lane.b32.xlu0 %v721, 124
        %v726 = vpop.permute.xlu0 %725
        %727 = vrot.lane.b32.xlu0 %v722, 124
        %v728 = vpop.permute.xlu0 %727
        %v731 = vadd.f32 %v717, %v726
        %v732 = vadd.f32 %v718, %v728
        %s733 = sld [smem:[#allocation5 + $0x1e]]
        %v734 = vstv %s733
        %v735 = vmul.f32 %v734, %v713
        %v736 = vmul.f32 %v734, %v714
        %739 = vrot.lane.b32.xlu0 %v735, 120
        %v740 = vpop.permute.xlu0 %739
        %741 = vrot.lane.b32.xlu0 %v736, 120
        %v742 = vpop.permute.xlu0 %741
        %v745 = vadd.f32 %v731, %v740
        %v746 = vadd.f32 %v732, %v742
        %s747 = sld [smem:[#allocation5 + $0x1f]]
        %v748 = vstv %s747
        %v749 = vmul.f32 %v748, %v713
        %v750 = vmul.f32 %v748, %v714
        %753 = vrot.lane.b32.xlu0 %v749, 116
        %v754 = vpop.permute.xlu0 %753
        %755 = vrot.lane.b32.xlu0 %v750, 116
        %v756 = vpop.permute.xlu0 %755
        %v759 = vadd.f32 %v745, %v754
        %v760 = vadd.f32 %v746, %v756
        %s761 = sld [smem:[#allocation5 + $0x20]]
        %v762 = vstv %s761
        %v763 = vmul.f32 %v762, %v713
        %v764 = vmul.f32 %v762, %v714
        %767 = vrot.lane.b32.xlu0 %v763, 112
        %v768 = vpop.permute.xlu0 %767
        %769 = vrot.lane.b32.xlu0 %v764, 112
        %v770 = vpop.permute.xlu0 %769
        %v773 = vadd.f32 %v759, %v768
        %v774 = vadd.f32 %v760, %v770
        %s775 = sld [smem:[#allocation5 + $0x21]]
        %v776 = vstv %s775
        %v777 = vmul.f32 %v776, %v713
        %v778 = vmul.f32 %v776, %v714
        %781 = vrot.lane.b32.xlu0 %v777, 108
        %v782 = vpop.permute.xlu0 %781
        %783 = vrot.lane.b32.xlu0 %v778, 108
        %v784 = vpop.permute.xlu0 %783
        %v787 = vadd.f32 %v773, %v782
        %v788 = vadd.f32 %v774, %v784
        %s789 = sld [smem:[#allocation5 + $0x22]]
        %v790 = vstv %s789
        %v791 = vmul.f32 %v790, %v713
        %v792 = vmul.f32 %v790, %v714
        %795 = vrot.lane.b32.xlu0 %v791, 104
        %v796 = vpop.permute.xlu0 %795
        %797 = vrot.lane.b32.xlu0 %v792, 104
        %v798 = vpop.permute.xlu0 %797
        %v801 = vadd.f32 %v787, %v796
        %v802 = vadd.f32 %v788, %v798
        %v803 = vld [vmem:[#allocation2 + $0x5] sm:$0xff]
        %v804 = vld [vmem:[#allocation2 + $0xd] sm:$0xff]
        %s805 = sld [smem:[#allocation5 + $0x23]]
        %v806 = vstv %s805
        %v807 = vmul.f32 %v806, %v803
        %v808 = vmul.f32 %v806, %v804
        %v809 = vadd.f32 %v801, %v807
        %v810 = vadd.f32 %v802, %v808
        %s811 = sld [smem:[#allocation5 + $0x24]]
        %v812 = vstv %s811
        %v813 = vmul.f32 %v812, %v803
        %v814 = vmul.f32 %v812, %v804
        %817 = vrot.lane.b32.xlu0 %v813, 124
        %v818 = vpop.permute.xlu0 %817
        %819 = vrot.lane.b32.xlu0 %v814, 124
        %v820 = vpop.permute.xlu0 %819
        %v823 = vadd.f32 %v809, %v818
        %v824 = vadd.f32 %v810, %v820
        %s825 = sld [smem:[#allocation5 + $0x25]]
        %v826 = vstv %s825
        %v827 = vmul.f32 %v826, %v803
        %v828 = vmul.f32 %v826, %v804
        %831 = vrot.lane.b32.xlu0 %v827, 120
        %v832 = vpop.permute.xlu0 %831
        %833 = vrot.lane.b32.xlu0 %v828, 120
        %v834 = vpop.permute.xlu0 %833
        %v837 = vadd.f32 %v823, %v832
        %v838 = vadd.f32 %v824, %v834
        %s839 = sld [smem:[#allocation5 + $0x26]]
        %v840 = vstv %s839
        %v841 = vmul.f32 %v840, %v803
        %v842 = vmul.f32 %v840, %v804
        %845 = vrot.lane.b32.xlu0 %v841, 116
        %v846 = vpop.permute.xlu0 %845
        %847 = vrot.lane.b32.xlu0 %v842, 116
        %v848 = vpop.permute.xlu0 %847
        %v851 = vadd.f32 %v837, %v846
        %v852 = vadd.f32 %v838, %v848
        %s853 = sld [smem:[#allocation5 + $0x27]]
        %v854 = vstv %s853
        %v855 = vmul.f32 %v854, %v803
        %v856 = vmul.f32 %v854, %v804
        %859 = vrot.lane.b32.xlu0 %v855, 112
        %v860 = vpop.permute.xlu0 %859
        %861 = vrot.lane.b32.xlu0 %v856, 112
        %v862 = vpop.permute.xlu0 %861
        %v865 = vadd.f32 %v851, %v860
        %v866 = vadd.f32 %v852, %v862
        %s867 = sld [smem:[#allocation5 + $0x28]]
        %v868 = vstv %s867
        %v869 = vmul.f32 %v868, %v803
        %v870 = vmul.f32 %v868, %v804
        %873 = vrot.lane.b32.xlu0 %v869, 108
        %v874 = vpop.permute.xlu0 %873
        %875 = vrot.lane.b32.xlu0 %v870, 108
        %v876 = vpop.permute.xlu0 %875
        %v879 = vadd.f32 %v865, %v874
        %v880 = vadd.f32 %v866, %v876
        %s881 = sld [smem:[#allocation5 + $0x29]]
        %v882 = vstv %s881
        %v883 = vmul.f32 %v882, %v803
        %v884 = vmul.f32 %v882, %v804
        %887 = vrot.lane.b32.xlu0 %v883, 104
        %v888 = vpop.permute.xlu0 %887
        %889 = vrot.lane.b32.xlu0 %v884, 104
        %v890 = vpop.permute.xlu0 %889
        %v893 = vadd.f32 %v879, %v888
        %v894 = vadd.f32 %v880, %v890
        %v895 = vld [vmem:[#allocation2 + $0x6] sm:$0xff]
        %v896 = vld [vmem:[#allocation2 + $0xe] sm:$0xff]
        %s897 = sld [smem:[#allocation5 + $0x2a]]
        %v898 = vstv %s897
        %v899 = vmul.f32 %v898, %v895
        %v900 = vmul.f32 %v898, %v896
        %v901 = vadd.f32 %v893, %v899
        %v902 = vadd.f32 %v894, %v900
        %s903 = sld [smem:[#allocation5 + $0x2b]]
        %v904 = vstv %s903
        %v905 = vmul.f32 %v904, %v895
        %v906 = vmul.f32 %v904, %v896
        %909 = vrot.lane.b32.xlu0 %v905, 124
        %v910 = vpop.permute.xlu0 %909
        %911 = vrot.lane.b32.xlu0 %v906, 124
        %v912 = vpop.permute.xlu0 %911
        %v915 = vadd.f32 %v901, %v910
        %v916 = vadd.f32 %v902, %v912
        %s917 = sld [smem:[#allocation5 + $0x2c]]
        %v918 = vstv %s917
        %v919 = vmul.f32 %v918, %v895
        %v920 = vmul.f32 %v918, %v896
        %923 = vrot.lane.b32.xlu0 %v919, 120
        %v924 = vpop.permute.xlu0 %923
        %925 = vrot.lane.b32.xlu0 %v920, 120
        %v926 = vpop.permute.xlu0 %925
        %v929 = vadd.f32 %v915, %v924
        %v930 = vadd.f32 %v916, %v926
        %s931 = sld [smem:[#allocation5 + $0x2d]]
        %v932 = vstv %s931
        %v933 = vmul.f32 %v932, %v895
        %v934 = vmul.f32 %v932, %v896
        %937 = vrot.lane.b32.xlu0 %v933, 116
        %v938 = vpop.permute.xlu0 %937
        %939 = vrot.lane.b32.xlu0 %v934, 116
        %v940 = vpop.permute.xlu0 %939
        %v943 = vadd.f32 %v929, %v938
        %v944 = vadd.f32 %v930, %v940
        %s945 = sld [smem:[#allocation5 + $0x2e]]
        %v946 = vstv %s945
        %v947 = vmul.f32 %v946, %v895
        %v948 = vmul.f32 %v946, %v896
        %951 = vrot.lane.b32.xlu0 %v947, 112
        %v952 = vpop.permute.xlu0 %951
        %953 = vrot.lane.b32.xlu0 %v948, 112
        %v954 = vpop.permute.xlu0 %953
        %v957 = vadd.f32 %v943, %v952
        %v958 = vadd.f32 %v944, %v954
        %s959 = sld [smem:[#allocation5 + $0x2f]]
        %v960 = vstv %s959
        %v961 = vmul.f32 %v960, %v895
        %v962 = vmul.f32 %v960, %v896
        %965 = vrot.lane.b32.xlu0 %v961, 108
        %v966 = vpop.permute.xlu0 %965
        %967 = vrot.lane.b32.xlu0 %v962, 108
        %v968 = vpop.permute.xlu0 %967
        %v971 = vadd.f32 %v957, %v966
        %v972 = vadd.f32 %v958, %v968
        %s973 = sld [smem:[#allocation5 + $0x30]]
        %v974 = vstv %s973
        %v975 = vmul.f32 %v974, %v895
        %v976 = vmul.f32 %v974, %v896
        %979 = vrot.lane.b32.xlu0 %v975, 104
        %v980 = vpop.permute.xlu0 %979
        %981 = vrot.lane.b32.xlu0 %v976, 104
        %v982 = vpop.permute.xlu0 %981
        %v985 = vadd.f32 %v971, %v980
        %v986 = vadd.f32 %v972, %v982
        %v987 = vld [vmem:[#allocation3] sm:$0xff]
        %v988 = vld [vmem:[#allocation3 + $0x8] sm:$0xff]
        %s989 = sld [smem:[#allocation5 + $0x31]]
        %v990 = vstv %s989
        %v991 = vmul.f32 %v990, %v987
        %v992 = vmul.f32 %v990, %v988
        %s993 = sld [smem:[#allocation5 + $0x32]]
        %v994 = vstv %s993
        %v995 = vmul.f32 %v994, %v987
        %v996 = vmul.f32 %v994, %v988
        %999 = vrot.lane.b32.xlu0 %v995, 124
        %v1000 = vpop.permute.xlu0 %999
        %1001 = vrot.lane.b32.xlu0 %v996, 124
        %v1002 = vpop.permute.xlu0 %1001
        %v1005 = vadd.f32 %v991, %v1000
        %v1006 = vadd.f32 %v992, %v1002
        %s1007 = sld [smem:[#allocation5 + $0x33]]
        %v1008 = vstv %s1007
        %v1009 = vmul.f32 %v1008, %v987
        %v1010 = vmul.f32 %v1008, %v988
        %1013 = vrot.lane.b32.xlu0 %v1009, 120
        %v1014 = vpop.permute.xlu0 %1013
        %1015 = vrot.lane.b32.xlu0 %v1010, 120
        %v1016 = vpop.permute.xlu0 %1015
        %v1019 = vadd.f32 %v1005, %v1014
        %v1020 = vadd.f32 %v1006, %v1016
        %s1021 = sld [smem:[#allocation5 + $0x34]]
        %v1022 = vstv %s1021
        %v1023 = vmul.f32 %v1022, %v987
        %v1024 = vmul.f32 %v1022, %v988
        %1027 = vrot.lane.b32.xlu0 %v1023, 116
        %v1028 = vpop.permute.xlu0 %1027
        %1029 = vrot.lane.b32.xlu0 %v1024, 116
        %v1030 = vpop.permute.xlu0 %1029
        %v1033 = vadd.f32 %v1019, %v1028
        %v1034 = vadd.f32 %v1020, %v1030
        %s1035 = sld [smem:[#allocation5 + $0x35]]
        %v1036 = vstv %s1035
        %v1037 = vmul.f32 %v1036, %v987
        %v1038 = vmul.f32 %v1036, %v988
        %1041 = vrot.lane.b32.xlu0 %v1037, 112
        %v1042 = vpop.permute.xlu0 %1041
        %1043 = vrot.lane.b32.xlu0 %v1038, 112
        %v1044 = vpop.permute.xlu0 %1043
        %v1047 = vadd.f32 %v1033, %v1042
        %v1048 = vadd.f32 %v1034, %v1044
        %s1049 = sld [smem:[#allocation5 + $0x36]]
        %v1050 = vstv %s1049
        %v1051 = vmul.f32 %v1050, %v987
        %v1052 = vmul.f32 %v1050, %v988
        %1055 = vrot.lane.b32.xlu0 %v1051, 108
        %v1056 = vpop.permute.xlu0 %1055
        %1057 = vrot.lane.b32.xlu0 %v1052, 108
        %v1058 = vpop.permute.xlu0 %1057
        %v1061 = vadd.f32 %v1047, %v1056
        %v1062 = vadd.f32 %v1048, %v1058
        %s1063 = sld [smem:[#allocation5 + $0x37]]
        %v1064 = vstv %s1063
        %v1065 = vmul.f32 %v1064, %v987
        %v1066 = vmul.f32 %v1064, %v988
        %1069 = vrot.lane.b32.xlu0 %v1065, 104
        %v1070 = vpop.permute.xlu0 %1069
        %1071 = vrot.lane.b32.xlu0 %v1066, 104
        %v1072 = vpop.permute.xlu0 %1071
        %v1075 = vadd.f32 %v1061, %v1070
        %v1076 = vadd.f32 %v1062, %v1072
        %v1077 = vld [vmem:[#allocation3 + $0x1] sm:$0xff]
        %v1078 = vld [vmem:[#allocation3 + $0x9] sm:$0xff]
        %s1079 = sld [smem:[#allocation5 + $0x38]]
        %v1080 = vstv %s1079
        %v1081 = vmul.f32 %v1080, %v1077
        %v1082 = vmul.f32 %v1080, %v1078
        %v1083 = vadd.f32 %v1075, %v1081
        %v1084 = vadd.f32 %v1076, %v1082
        %s1085 = sld [smem:[#allocation5 + $0x39]]
        %v1086 = vstv %s1085
        %v1087 = vmul.f32 %v1086, %v1077
        %v1088 = vmul.f32 %v1086, %v1078
        %1091 = vrot.lane.b32.xlu0 %v1087, 124
        %v1092 = vpop.permute.xlu0 %1091
        %1093 = vrot.lane.b32.xlu0 %v1088, 124
        %v1094 = vpop.permute.xlu0 %1093
        %v1097 = vadd.f32 %v1083, %v1092
        %v1098 = vadd.f32 %v1084, %v1094
        %s1099 = sld [smem:[#allocation5 + $0x3a]]
        %v1100 = vstv %s1099
        %v1101 = vmul.f32 %v1100, %v1077
        %v1102 = vmul.f32 %v1100, %v1078
        %1105 = vrot.lane.b32.xlu0 %v1101, 120
        %v1106 = vpop.permute.xlu0 %1105
        %1107 = vrot.lane.b32.xlu0 %v1102, 120
        %v1108 = vpop.permute.xlu0 %1107
        %v1111 = vadd.f32 %v1097, %v1106
        %v1112 = vadd.f32 %v1098, %v1108
        %s1113 = sld [smem:[#allocation5 + $0x3b]]
        %v1114 = vstv %s1113
        %v1115 = vmul.f32 %v1114, %v1077
        %v1116 = vmul.f32 %v1114, %v1078
        %1119 = vrot.lane.b32.xlu0 %v1115, 116
        %v1120 = vpop.permute.xlu0 %1119
        %1121 = vrot.lane.b32.xlu0 %v1116, 116
        %v1122 = vpop.permute.xlu0 %1121
        %v1125 = vadd.f32 %v1111, %v1120
        %v1126 = vadd.f32 %v1112, %v1122
        %s1127 = sld [smem:[#allocation5 + $0x3c]]
        %v1128 = vstv %s1127
        %v1129 = vmul.f32 %v1128, %v1077
        %v1130 = vmul.f32 %v1128, %v1078
        %1133 = vrot.lane.b32.xlu0 %v1129, 112
        %v1134 = vpop.permute.xlu0 %1133
        %1135 = vrot.lane.b32.xlu0 %v1130, 112
        %v1136 = vpop.permute.xlu0 %1135
        %v1139 = vadd.f32 %v1125, %v1134
        %v1140 = vadd.f32 %v1126, %v1136
        %s1141 = sld [smem:[#allocation5 + $0x3d]]
        %v1142 = vstv %s1141
        %v1143 = vmul.f32 %v1142, %v1077
        %v1144 = vmul.f32 %v1142, %v1078
        %1147 = vrot.lane.b32.xlu0 %v1143, 108
        %v1148 = vpop.permute.xlu0 %1147
        %1149 = vrot.lane.b32.xlu0 %v1144, 108
        %v1150 = vpop.permute.xlu0 %1149
        %v1153 = vadd.f32 %v1139, %v1148
        %v1154 = vadd.f32 %v1140, %v1150
        %s1155 = sld [smem:[#allocation5 + $0x3e]]
        %v1156 = vstv %s1155
        %v1157 = vmul.f32 %v1156, %v1077
        %v1158 = vmul.f32 %v1156, %v1078
        %1161 = vrot.lane.b32.xlu0 %v1157, 104
        %v1162 = vpop.permute.xlu0 %1161
        %1163 = vrot.lane.b32.xlu0 %v1158, 104
        %v1164 = vpop.permute.xlu0 %1163
        %v1167 = vadd.f32 %v1153, %v1162
        %v1168 = vadd.f32 %v1154, %v1164
        %v1169 = vld [vmem:[#allocation3 + $0x2] sm:$0xff]
        %v1170 = vld [vmem:[#allocation3 + $0xa] sm:$0xff]
        %s1171 = sld [smem:[#allocation5 + $0x3f]]
        %v1172 = vstv %s1171
        %v1173 = vmul.f32 %v1172, %v1169
        %v1174 = vmul.f32 %v1172, %v1170
        %v1175 = vadd.f32 %v1167, %v1173
        %v1176 = vadd.f32 %v1168, %v1174
        %s1177 = sld [smem:[#allocation5 + $0x40]]
        %v1178 = vstv %s1177
        %v1179 = vmul.f32 %v1178, %v1169
        %v1180 = vmul.f32 %v1178, %v1170
        %1183 = vrot.lane.b32.xlu0 %v1179, 124
        %v1184 = vpop.permute.xlu0 %1183
        %1185 = vrot.lane.b32.xlu0 %v1180, 124
        %v1186 = vpop.permute.xlu0 %1185
        %v1189 = vadd.f32 %v1175, %v1184
        %v1190 = vadd.f32 %v1176, %v1186
        %s1191 = sld [smem:[#allocation5 + $0x41]]
        %v1192 = vstv %s1191
        %v1193 = vmul.f32 %v1192, %v1169
        %v1194 = vmul.f32 %v1192, %v1170
        %1197 = vrot.lane.b32.xlu0 %v1193, 120
        %v1198 = vpop.permute.xlu0 %1197
        %1199 = vrot.lane.b32.xlu0 %v1194, 120
        %v1200 = vpop.permute.xlu0 %1199
        %v1203 = vadd.f32 %v1189, %v1198
        %v1204 = vadd.f32 %v1190, %v1200
        %s1205 = sld [smem:[#allocation5 + $0x42]]
        %v1206 = vstv %s1205
        %v1207 = vmul.f32 %v1206, %v1169
        %v1208 = vmul.f32 %v1206, %v1170
        %1211 = vrot.lane.b32.xlu0 %v1207, 116
        %v1212 = vpop.permute.xlu0 %1211
        %1213 = vrot.lane.b32.xlu0 %v1208, 116
        %v1214 = vpop.permute.xlu0 %1213
        %v1217 = vadd.f32 %v1203, %v1212
        %v1218 = vadd.f32 %v1204, %v1214
        %s1219 = sld [smem:[#allocation5 + $0x43]]
        %v1220 = vstv %s1219
        %v1221 = vmul.f32 %v1220, %v1169
        %v1222 = vmul.f32 %v1220, %v1170
        %1225 = vrot.lane.b32.xlu0 %v1221, 112
        %v1226 = vpop.permute.xlu0 %1225
        %1227 = vrot.lane.b32.xlu0 %v1222, 112
        %v1228 = vpop.permute.xlu0 %1227
        %v1231 = vadd.f32 %v1217, %v1226
        %v1232 = vadd.f32 %v1218, %v1228
        %s1233 = sld [smem:[#allocation5 + $0x44]]
        %v1234 = vstv %s1233
        %v1235 = vmul.f32 %v1234, %v1169
        %v1236 = vmul.f32 %v1234, %v1170
        %1239 = vrot.lane.b32.xlu0 %v1235, 108
        %v1240 = vpop.permute.xlu0 %1239
        %1241 = vrot.lane.b32.xlu0 %v1236, 108
        %v1242 = vpop.permute.xlu0 %1241
        %v1245 = vadd.f32 %v1231, %v1240
        %v1246 = vadd.f32 %v1232, %v1242
        %s1247 = sld [smem:[#allocation5 + $0x45]]
        %v1248 = vstv %s1247
        %v1249 = vmul.f32 %v1248, %v1169
        %v1250 = vmul.f32 %v1248, %v1170
        %1253 = vrot.lane.b32.xlu0 %v1249, 104
        %v1254 = vpop.permute.xlu0 %1253
        %1255 = vrot.lane.b32.xlu0 %v1250, 104
        %v1256 = vpop.permute.xlu0 %1255
        %v1259 = vadd.f32 %v1245, %v1254
        %v1260 = vadd.f32 %v1246, %v1256
        %v1261 = vld [vmem:[#allocation3 + $0x3] sm:$0xff]
        %v1262 = vld [vmem:[#allocation3 + $0xb] sm:$0xff]
        %s1263 = sld [smem:[#allocation5 + $0x46]]
        %v1264 = vstv %s1263
        %v1265 = vmul.f32 %v1264, %v1261
        %v1266 = vmul.f32 %v1264, %v1262
        %v1267 = vadd.f32 %v1259, %v1265
        %v1268 = vadd.f32 %v1260, %v1266
        %s1269 = sld [smem:[#allocation5 + $0x47]]
        %v1270 = vstv %s1269
        %v1271 = vmul.f32 %v1270, %v1261
        %v1272 = vmul.f32 %v1270, %v1262
        %1275 = vrot.lane.b32.xlu0 %v1271, 124
        %v1276 = vpop.permute.xlu0 %1275
        %1277 = vrot.lane.b32.xlu0 %v1272, 124
        %v1278 = vpop.permute.xlu0 %1277
        %v1281 = vadd.f32 %v1267, %v1276
        %v1282 = vadd.f32 %v1268, %v1278
        %s1283 = sld [smem:[#allocation5 + $0x48]]
        %v1284 = vstv %s1283
        %v1285 = vmul.f32 %v1284, %v1261
        %v1286 = vmul.f32 %v1284, %v1262
        %1289 = vrot.lane.b32.xlu0 %v1285, 120
        %v1290 = vpop.permute.xlu0 %1289
        %1291 = vrot.lane.b32.xlu0 %v1286, 120
        %v1292 = vpop.permute.xlu0 %1291
        %v1295 = vadd.f32 %v1281, %v1290
        %v1296 = vadd.f32 %v1282, %v1292
        %s1297 = sld [smem:[#allocation5 + $0x49]]
        %v1298 = vstv %s1297
        %v1299 = vmul.f32 %v1298, %v1261
        %v1300 = vmul.f32 %v1298, %v1262
        %1303 = vrot.lane.b32.xlu0 %v1299, 116
        %v1304 = vpop.permute.xlu0 %1303
        %1305 = vrot.lane.b32.xlu0 %v1300, 116
        %v1306 = vpop.permute.xlu0 %1305
        %v1309 = vadd.f32 %v1295, %v1304
        %v1310 = vadd.f32 %v1296, %v1306
        %s1311 = sld [smem:[#allocation5 + $0x4a]]
        %v1312 = vstv %s1311
        %v1313 = vmul.f32 %v1312, %v1261
        %v1314 = vmul.f32 %v1312, %v1262
        %1317 = vrot.lane.b32.xlu0 %v1313, 112
        %v1318 = vpop.permute.xlu0 %1317
        %1319 = vrot.lane.b32.xlu0 %v1314, 112
        %v1320 = vpop.permute.xlu0 %1319
        %v1323 = vadd.f32 %v1309, %v1318
        %v1324 = vadd.f32 %v1310, %v1320
        %s1325 = sld [smem:[#allocation5 + $0x4b]]
        %v1326 = vstv %s1325
        %v1327 = vmul.f32 %v1326, %v1261
        %v1328 = vmul.f32 %v1326, %v1262
        %1331 = vrot.lane.b32.xlu0 %v1327, 108
        %v1332 = vpop.permute.xlu0 %1331
        %1333 = vrot.lane.b32.xlu0 %v1328, 108
        %v1334 = vpop.permute.xlu0 %1333
        %v1337 = vadd.f32 %v1323, %v1332
        %v1338 = vadd.f32 %v1324, %v1334
        %s1339 = sld [smem:[#allocation5 + $0x4c]]
        %v1340 = vstv %s1339
        %v1341 = vmul.f32 %v1340, %v1261
        %v1342 = vmul.f32 %v1340, %v1262
        %1345 = vrot.lane.b32.xlu0 %v1341, 104
        %v1346 = vpop.permute.xlu0 %1345
        %1347 = vrot.lane.b32.xlu0 %v1342, 104
        %v1348 = vpop.permute.xlu0 %1347
        %v1351 = vadd.f32 %v1337, %v1346
        %v1352 = vadd.f32 %v1338, %v1348
        %v1353 = vld [vmem:[#allocation3 + $0x4] sm:$0xff]
        %v1354 = vld [vmem:[#allocation3 + $0xc] sm:$0xff]
        %s1355 = sld [smem:[#allocation5 + $0x4d]]
        %v1356 = vstv %s1355
        %v1357 = vmul.f32 %v1356, %v1353
        %v1358 = vmul.f32 %v1356, %v1354
        %s1359 = sld [smem:[#allocation5 + $0x4e]]
        %v1360 = vstv %s1359
        %v1361 = vmul.f32 %v1360, %v1353
        %v1362 = vmul.f32 %v1360, %v1354
        %1365 = vrot.lane.b32.xlu0 %v1361, 124
        %v1366 = vpop.permute.xlu0 %1365
        %1367 = vrot.lane.b32.xlu0 %v1362, 124
        %v1368 = vpop.permute.xlu0 %1367
        %v1371 = vadd.f32 %v1357, %v1366
        %v1372 = vadd.f32 %v1358, %v1368
        %s1373 = sld [smem:[#allocation5 + $0x4f]]
        %v1374 = vstv %s1373
        %v1375 = vmul.f32 %v1374, %v1353
        %v1376 = vmul.f32 %v1374, %v1354
        %1379 = vrot.lane.b32.xlu0 %v1375, 120
        %v1380 = vpop.permute.xlu0 %1379
        %1381 = vrot.lane.b32.xlu0 %v1376, 120
        %v1382 = vpop.permute.xlu0 %1381
        %v1385 = vadd.f32 %v1371, %v1380
        %v1386 = vadd.f32 %v1372, %v1382
        %s1387 = sld [smem:[#allocation5 + $0x50]]
        %v1388 = vstv %s1387
        %v1389 = vmul.f32 %v1388, %v1353
        %v1390 = vmul.f32 %v1388, %v1354
        %1393 = vrot.lane.b32.xlu0 %v1389, 116
        %v1394 = vpop.permute.xlu0 %1393
        %1395 = vrot.lane.b32.xlu0 %v1390, 116
        %v1396 = vpop.permute.xlu0 %1395
        %v1399 = vadd.f32 %v1385, %v1394
        %v1400 = vadd.f32 %v1386, %v1396
        %s1401 = sld [smem:[#allocation5 + $0x51]]
        %v1402 = vstv %s1401
        %v1403 = vmul.f32 %v1402, %v1353
        %v1404 = vmul.f32 %v1402, %v1354
        %1407 = vrot.lane.b32.xlu0 %v1403, 112
        %v1408 = vpop.permute.xlu0 %1407
        %1409 = vrot.lane.b32.xlu0 %v1404, 112
        %v1410 = vpop.permute.xlu0 %1409
        %v1413 = vadd.f32 %v1399, %v1408
        %v1414 = vadd.f32 %v1400, %v1410
        %s1415 = sld [smem:[#allocation5 + $0x52]]
        %v1416 = vstv %s1415
        %v1417 = vmul.f32 %v1416, %v1353
        %v1418 = vmul.f32 %v1416, %v1354
        %1421 = vrot.lane.b32.xlu0 %v1417, 108
        %v1422 = vpop.permute.xlu0 %1421
        %1423 = vrot.lane.b32.xlu0 %v1418, 108
        %v1424 = vpop.permute.xlu0 %1423
        %v1427 = vadd.f32 %v1413, %v1422
        %v1428 = vadd.f32 %v1414, %v1424
        %s1429 = sld [smem:[#allocation5 + $0x53]]
        %v1430 = vstv %s1429
        %v1431 = vmul.f32 %v1430, %v1353
        %v1432 = vmul.f32 %v1430, %v1354
        %1435 = vrot.lane.b32.xlu0 %v1431, 104
        %v1436 = vpop.permute.xlu0 %1435
        %1437 = vrot.lane.b32.xlu0 %v1432, 104
        %v1438 = vpop.permute.xlu0 %1437
        %v1441 = vadd.f32 %v1427, %v1436
        %v1442 = vadd.f32 %v1428, %v1438
        %v1443 = vld [vmem:[#allocation3 + $0x5] sm:$0xff]
        %v1444 = vld [vmem:[#allocation3 + $0xd] sm:$0xff]
        %s1445 = sld [smem:[#allocation5 + $0x54]]
        %v1446 = vstv %s1445
        %v1447 = vmul.f32 %v1446, %v1443
        %v1448 = vmul.f32 %v1446, %v1444
        %v1449 = vadd.f32 %v1441, %v1447
        %v1450 = vadd.f32 %v1442, %v1448
        %s1451 = sld [smem:[#allocation5 + $0x55]]
        %v1452 = vstv %s1451
        %v1453 = vmul.f32 %v1452, %v1443
        %v1454 = vmul.f32 %v1452, %v1444
        %1457 = vrot.lane.b32.xlu0 %v1453, 124
        %v1458 = vpop.permute.xlu0 %1457
        %1459 = vrot.lane.b32.xlu0 %v1454, 124
        %v1460 = vpop.permute.xlu0 %1459
        %v1463 = vadd.f32 %v1449, %v1458
        %v1464 = vadd.f32 %v1450, %v1460
        %s1465 = sld [smem:[#allocation5 + $0x56]]
        %v1466 = vstv %s1465
        %v1467 = vmul.f32 %v1466, %v1443
        %v1468 = vmul.f32 %v1466, %v1444
        %1471 = vrot.lane.b32.xlu0 %v1467, 120
        %v1472 = vpop.permute.xlu0 %1471
        %1473 = vrot.lane.b32.xlu0 %v1468, 120
        %v1474 = vpop.permute.xlu0 %1473
        %v1477 = vadd.f32 %v1463, %v1472
        %v1478 = vadd.f32 %v1464, %v1474
        %s1479 = sld [smem:[#allocation5 + $0x57]]
        %v1480 = vstv %s1479
        %v1481 = vmul.f32 %v1480, %v1443
        %v1482 = vmul.f32 %v1480, %v1444
        %1485 = vrot.lane.b32.xlu0 %v1481, 116
        %v1486 = vpop.permute.xlu0 %1485
        %1487 = vrot.lane.b32.xlu0 %v1482, 116
        %v1488 = vpop.permute.xlu0 %1487
        %v1491 = vadd.f32 %v1477, %v1486
        %v1492 = vadd.f32 %v1478, %v1488
        %s1493 = sld [smem:[#allocation5 + $0x58]]
        %v1494 = vstv %s1493
        %v1495 = vmul.f32 %v1494, %v1443
        %v1496 = vmul.f32 %v1494, %v1444
        %1499 = vrot.lane.b32.xlu0 %v1495, 112
        %v1500 = vpop.permute.xlu0 %1499
        %1501 = vrot.lane.b32.xlu0 %v1496, 112
        %v1502 = vpop.permute.xlu0 %1501
        %v1505 = vadd.f32 %v1491, %v1500
        %v1506 = vadd.f32 %v1492, %v1502
        %s1507 = sld [smem:[#allocation5 + $0x59]]
        %v1508 = vstv %s1507
        %v1509 = vmul.f32 %v1508, %v1443
        %v1510 = vmul.f32 %v1508, %v1444
        %1513 = vrot.lane.b32.xlu0 %v1509, 108
        %v1514 = vpop.permute.xlu0 %1513
        %1515 = vrot.lane.b32.xlu0 %v1510, 108
        %v1516 = vpop.permute.xlu0 %1515
        %v1519 = vadd.f32 %v1505, %v1514
        %v1520 = vadd.f32 %v1506, %v1516
        %s1521 = sld [smem:[#allocation5 + $0x5a]]
        %v1522 = vstv %s1521
        %v1523 = vmul.f32 %v1522, %v1443
        %v1524 = vmul.f32 %v1522, %v1444
        %1527 = vrot.lane.b32.xlu0 %v1523, 104
        %v1528 = vpop.permute.xlu0 %1527
        %1529 = vrot.lane.b32.xlu0 %v1524, 104
        %v1530 = vpop.permute.xlu0 %1529
        %v1533 = vadd.f32 %v1519, %v1528
        %v1534 = vadd.f32 %v1520, %v1530
        %v1535 = vld [vmem:[#allocation3 + $0x6] sm:$0xff]
        %v1536 = vld [vmem:[#allocation3 + $0xe] sm:$0xff]
        %s1537 = sld [smem:[#allocation5 + $0x5b]]
        %v1538 = vstv %s1537
        %v1539 = vmul.f32 %v1538, %v1535
        %v1540 = vmul.f32 %v1538, %v1536
        %v1541 = vadd.f32 %v1533, %v1539
        %v1542 = vadd.f32 %v1534, %v1540
        %s1543 = sld [smem:[#allocation5 + $0x5c]]
        %v1544 = vstv %s1543
        %v1545 = vmul.f32 %v1544, %v1535
        %v1546 = vmul.f32 %v1544, %v1536
        %1549 = vrot.lane.b32.xlu0 %v1545, 124
        %v1550 = vpop.permute.xlu0 %1549
        %1551 = vrot.lane.b32.xlu0 %v1546, 124
        %v1552 = vpop.permute.xlu0 %1551
        %v1555 = vadd.f32 %v1541, %v1550
        %v1556 = vadd.f32 %v1542, %v1552
        %s1557 = sld [smem:[#allocation5 + $0x5d]]
        %v1558 = vstv %s1557
        %v1559 = vmul.f32 %v1558, %v1535
        %v1560 = vmul.f32 %v1558, %v1536
        %1563 = vrot.lane.b32.xlu0 %v1559, 120
        %v1564 = vpop.permute.xlu0 %1563
        %1565 = vrot.lane.b32.xlu0 %v1560, 120
        %v1566 = vpop.permute.xlu0 %1565
        %v1569 = vadd.f32 %v1555, %v1564
        %v1570 = vadd.f32 %v1556, %v1566
        %s1571 = sld [smem:[#allocation5 + $0x5e]]
        %v1572 = vstv %s1571
        %v1573 = vmul.f32 %v1572, %v1535
        %v1574 = vmul.f32 %v1572, %v1536
        %1577 = vrot.lane.b32.xlu0 %v1573, 116
        %v1578 = vpop.permute.xlu0 %1577
        %1579 = vrot.lane.b32.xlu0 %v1574, 116
        %v1580 = vpop.permute.xlu0 %1579
        %v1583 = vadd.f32 %v1569, %v1578
        %v1584 = vadd.f32 %v1570, %v1580
        %s1585 = sld [smem:[#allocation5 + $0x5f]]
        %v1586 = vstv %s1585
        %v1587 = vmul.f32 %v1586, %v1535
        %v1588 = vmul.f32 %v1586, %v1536
        %1591 = vrot.lane.b32.xlu0 %v1587, 112
        %v1592 = vpop.permute.xlu0 %1591
        %1593 = vrot.lane.b32.xlu0 %v1588, 112
        %v1594 = vpop.permute.xlu0 %1593
        %v1597 = vadd.f32 %v1583, %v1592
        %v1598 = vadd.f32 %v1584, %v1594
        %s1599 = sld [smem:[#allocation5 + $0x60]]
        %v1600 = vstv %s1599
        %v1601 = vmul.f32 %v1600, %v1535
        %v1602 = vmul.f32 %v1600, %v1536
        %1605 = vrot.lane.b32.xlu0 %v1601, 108
        %v1606 = vpop.permute.xlu0 %1605
        %1607 = vrot.lane.b32.xlu0 %v1602, 108
        %v1608 = vpop.permute.xlu0 %1607
        %v1611 = vadd.f32 %v1597, %v1606
        %v1612 = vadd.f32 %v1598, %v1608
        %s1613 = sld [smem:[#allocation5 + $0x61]]
        %v1614 = vstv %s1613
        %v1615 = vmul.f32 %v1614, %v1535
        %v1616 = vmul.f32 %v1614, %v1536
        %1619 = vrot.lane.b32.xlu0 %v1615, 104
        %v1620 = vpop.permute.xlu0 %1619
        %1621 = vrot.lane.b32.xlu0 %v1616, 104
        %v1622 = vpop.permute.xlu0 %1621
        %v1625 = vadd.f32 %v1611, %v1620
        %v1626 = vadd.f32 %v1612, %v1622
        %v1627 = vadd.f32 %v711, %v985
        %v1628 = vadd.f32 %v712, %v986
        %v1629 = vadd.f32 %v1351, %v1625
        %v1630 = vadd.f32 %v1352, %v1626
        %v1631 = vadd.f32 %v1627, %v1629
        %v1632 = vadd.f32 %v1628, %v1630
        %s1633 = sld [smem:[#allocation4]]
        %v1634 = vstv %s1633
        %v1635 = vadd.f32 %v1631, %v1634
        %v1636 = vadd.f32 %v1632, %v1634
        %v1637 = vxor.u32 %v1635, 2147483648
        %v1638 = vxor.u32 %v1636, 2147483648
        %v1639 = vmul.f32 %v1637, 1.442695
        %v1640 = vpow.pop %v1639
        %v1641 = vmul.f32 %v1638, 1.442695
        %v1642 = vpow.pop %v1641
        %v1643 = vadd.f32 %v1640, 1.0
        %v1644 = vadd.f32 %v1642, 1.0
        %v1645 = vrcp.pop %v1643
        %v1646 = vmul.f32 1.0, %v1645
        %v1647 = vrcp.pop %v1644
        %v1648 = vmul.f32 1.0, %v1647
        %v1649 = vld [vmem:[%s240] sm:$0xff]
        %v1650 = vld [vmem:[%s240 + $0x8] sm:$0xff]
        %v1651 = vld [vmem:[%s240 + $0x10] sm:$0xff]
        %v1652 = vld [vmem:[%s240 + $0x18] sm:$0xff]
        %v1653 = vld [vmem:[%s240 + $0x20] sm:$0xff]
        %v1654 = vld [vmem:[%s240 + $0x28] sm:$0xff]
        %v1655 = vld [vmem:[%s240 + $0x30] sm:$0xff]
        %v1656 = vld [vmem:[%s240 + $0x38] sm:$0xff]
        %v1657 = vld [vmem:[%s240 + $0x40] sm:$0xff]
        %v1658 = vld [vmem:[%s240 + $0x48] sm:$0xff]
        %v1659 = vld [vmem:[%s240 + $0x50] sm:$0xff]
        %v1660 = vld [vmem:[%s240 + $0x58] sm:$0xff]
        %v1661 = vld [vmem:[%s240 + $0x60] sm:$0xff]
        %v1662 = vld [vmem:[%s240 + $0x68] sm:$0xff]
        %v1663 = vld [vmem:[%s240 + $0x70] sm:$0xff]
        %v1664 = vld [vmem:[%s240 + $0x78] sm:$0xff]
        %v1665 = vmul.f32 %v1649, %v1646
        %v1666 = vmul.f32 %v1650, %v1648
        %v1667 = vmul.f32 %v1651, %v1646
        %v1668 = vmul.f32 %v1652, %v1648
        %v1669 = vmul.f32 %v1653, %v1646
        %v1670 = vmul.f32 %v1654, %v1648
        %v1671 = vmul.f32 %v1655, %v1646
        %v1672 = vmul.f32 %v1656, %v1648
        %v1673 = vmul.f32 %v1657, %v1646
        %v1674 = vmul.f32 %v1658, %v1648
        %v1675 = vmul.f32 %v1659, %v1646
        %v1676 = vmul.f32 %v1660, %v1648
        %v1677 = vmul.f32 %v1661, %v1646
        %v1678 = vmul.f32 %v1662, %v1648
        %v1679 = vmul.f32 %v1663, %v1646
        %v1680 = vmul.f32 %v1664, %v1648
        %1681 = vst.msk [vmem:[%s270] sm:$0xff] %vm279, %v1665
        %1682 = vst.msk [vmem:[%s270 + $0x8] sm:$0xff] %vm279, %v1666
        %1683 = vst.msk [vmem:[%s270 + $0x10] sm:$0xff] %vm279, %v1667
        %1684 = vst.msk [vmem:[%s270 + $0x18] sm:$0xff] %vm279, %v1668
        %1685 = vst.msk [vmem:[%s270 + $0x20] sm:$0xff] %vm279, %v1669
        %1686 = vst.msk [vmem:[%s270 + $0x28] sm:$0xff] %vm279, %v1670
        %1687 = vst.msk [vmem:[%s270 + $0x30] sm:$0xff] %vm279, %v1671
        %1688 = vst.msk [vmem:[%s270 + $0x38] sm:$0xff] %vm279, %v1672
        %1689 = vst.msk [vmem:[%s270 + $0x40] sm:$0xff] %vm279, %v1673
        %1690 = vst.msk [vmem:[%s270 + $0x48] sm:$0xff] %vm279, %v1674
        %1691 = vst.msk [vmem:[%s270 + $0x50] sm:$0xff] %vm279, %v1675
        %1692 = vst.msk [vmem:[%s270 + $0x58] sm:$0xff] %vm279, %v1676
        %1693 = vst.msk [vmem:[%s270 + $0x60] sm:$0xff] %vm279, %v1677
        %1694 = vst.msk [vmem:[%s270 + $0x68] sm:$0xff] %vm279, %v1678
        %1695 = vst.msk [vmem:[%s270 + $0x70] sm:$0xff] %vm279, %v1679
        %1696 = vst.msk [vmem:[%s270 + $0x78] sm:$0xff] %vm279, %v1680
        %s1697 = sand.u32 %s128, 1
        %s1698 = scalar_lea.sflag [#allocation7], %s1697
        %s1699 = sand.u32 %s128, 1
        %s1700 = smul.addr %s1699, 128
        %s1701 = scalar_lea.vmem [#allocation12], %s1700
        // Predicated region
        $region49: #{tpu_custom_call.1} parent=35 // pred_check
          %p1702 = pneg %p138
        $region50: #{tpu_custom_call.1} parent=35 // pred_check_branch
          %1704 = sbr.rel (%p1702) target = $region52
        $region51: #{tpu_custom_call.1} parent=35 // pred_region
          %s1706 = ssub.s32 2048, 2048
          %1707 = vsyncadd %s1698, %s1706
          %s1708 = smul.addr %s26, 16
          %s1709 = smul.addr %s1708, 128
          %s1710 = scalar_lea.hbm %s4, %s1709
          %s1711 = sshll.u32 %s1701, 4
          %s1712 = int_to_ptr.vmem [resolvable:$true] %s1711
          %1717 = dma.vmem_to_hbm [thread:$0]  %s1712, 2048, %s1710, %s1698, 128, 128, 8
        $region52: #{tpu_custom_call.1} parent=35 // pred_fallthru
          _
      $region36: #{tpu_custom_call.1} parent=5 // pred_fallthru
        _
      %p1718 = scmp.le.s32.totalorder 2, %s21
      // Predicated region
      $region53: #{tpu_custom_call.1} parent=5 // pred_check
        %p1719 = pneg %p1718
      $region54: #{tpu_custom_call.1} parent=5 // pred_check_branch
        %1721 = sbr.rel (%p1719) target = $region56
      $region55: #{tpu_custom_call.1} parent=5 // pred_region
        %s1722 = ssub.s32 %s21, 2
        // Predicated region
        $region57: #{tpu_custom_call.1} parent=55 // pred_check
          %p1723 = pneg %p144
        $region58: #{tpu_custom_call.1} parent=55 // pred_check_branch
          %1725 = sbr.rel (%p1723) target = $region60
        $region59: #{tpu_custom_call.1} parent=55 // pred_region
          %s1726 = sand.u32 %s129, 1
          %s1727 = scalar_lea.sflag [#allocation7], %s1726
          %s1728 = sand.u32 %s129, 1
          %s1729 = smul.addr %s1728, 128
          %s1730 = scalar_lea.vmem [#allocation12], %s1729
          %1731 = dma.done %s1727, 2048
        $region60: #{tpu_custom_call.1} parent=55 // pred_fallthru
          _
      $region56: #{tpu_custom_call.1} parent=5 // pred_fallthru
        _
    $region6: #{tpu_custom_call.1} parent=1 // loop_footer
      %s25 = sadd.s32 1, %s21
    $region7: #{tpu_custom_call.1} parent=1 // loop_footer_branch
      %20 = sbr.rel target = $region3
    $region8: #{tpu_custom_call.1} parent=1 // loop_exit
      _
    %1732 = vsyncpa [#allocation6], 1
    %s1733 = scalar_lea.sflag [#allocation6], 1
    %1734 = vsyncpa %s1733, 1
    %1735 = vsyncpa [#allocation11], 1
    %s1736 = scalar_lea.sflag [#allocation11], 1
    %1737 = vsyncpa %s1736, 1
    %1738 = vsyncpa [#allocation7], 1
    %s1739 = scalar_lea.sflag [#allocation7], 1
    %1740 = vsyncpa %s1739, 1
    %1741 = vsyncpa [#allocation8], 1
    %s1742 = scalar_lea.sflag [#allocation8], 1
    %1743 = vsyncpa %s1742, 1

</llo_original>
